<compile_context>
chip_gen: v7x
topology: tpu7x:2x2x1
jax: 0.10.0
libtpu: 0.0.40
codegen_flags: <defaults>
</compile_context>

<pallas_src>
import math
import functools

import jax
import jax.numpy as jnp
from jax.experimental import pallas as pl
from jax.experimental.pallas import tpu as pltpu


# ---------------------------------------------------------------------------
# Fused kernel: one TransformerEncoderLayer per grid step along the layer axis.
# The activation block stays resident in out_ref across the layer axis.
# ---------------------------------------------------------------------------

def bert_stack_kernel(comb_ref, wqkv_ref, wo_ref, w1_ref, w2_ref, vec_ref,
                      out_ref, *, num_heads):
    # Layer 0: load the pre-combined embeddings into the resident activation block.
    @pl.when(pl.program_id(1) == 0)
    def _():
        out_ref[...] = comb_ref[...]

    x3 = out_ref[...]                       # (bt, S, E) f32 — resident across layers
    bt, S, E = x3.shape
    H = num_heads
    Dh = E // H
    scale = 1.0 / math.sqrt(Dh)

    # Packed per-layer vector slab: (8, F) f32.  Row layout (see pack_layer_vectors):
    #   0: bqkv (3E)   1: bo (E)   2: ln1_g (E)  3: ln1_b (E)
    #   4: b1 (F)      5: b2 (E)   6: ln2_g (E)  7: ln2_b (E)
    vec = vec_ref[0]
    bqkv = vec[0, :3 * E]
    bo   = vec[1, :E]
    ln1g = vec[2, :E]
    ln1b = vec[3, :E]
    b1   = vec[4, :]
    b2   = vec[5, :E]
    ln2g = vec[6, :E]
    ln2b = vec[7, :E]

    x = x3.reshape(bt * S, E)               # merge leading dims (layout-preserving)
    xb = x.astype(jnp.bfloat16)

    # --- fused QKV projection: one MXU pass with N=3E (bf16 in, f32 acc) ---
    qkv = jnp.dot(xb, wqkv_ref[0], preferred_element_type=jnp.float32) + bqkv   # (bt*S, 3E)
    q = qkv[:, :E].reshape(bt, S, E)                                            # f32
    k = qkv[:, E:2 * E].astype(jnp.bfloat16).reshape(bt, S, E)
    v = qkv[:, 2 * E:].astype(jnp.bfloat16).reshape(bt, S, E)

    # --- multi-head self attention via lane masks (no sub-vreg head extracts) ---
    lane = jax.lax.broadcasted_iota(jnp.int32, (1, E), 1)                       # (1, E)
    ctx = jnp.zeros((bt, S, E), jnp.float32)
    for h in range(H):                      # static unroll over heads
        mask = ((lane >= h * Dh) & (lane < (h + 1) * Dh)).astype(jnp.float32)   # (1, E)
        qh = (q * mask).astype(jnp.bfloat16)          # zero outside head h lanes
        s = jnp.einsum('bqd,bkd->bqk', qh, k,
                       preferred_element_type=jnp.float32) * scale              # (bt,S,S)
        m = jnp.max(s, axis=-1, keepdims=True)
        p = jnp.exp(s - m)
        inv = pl.reciprocal(jnp.sum(p, axis=-1, keepdims=True), approx=True)
        attn = (p * inv).astype(jnp.bfloat16)
        # Full-width context matmul, masked back to this head's lanes: accumulates the
        # concatenated multi-head output directly (no concatenate / dynamic-update).
        ctx = ctx + jnp.einsum('bqk,bkd->bqd', attn, v,
                               preferred_element_type=jnp.float32) * mask

    # --- single output projection over the full E (replaces per-head W_o folds) ---
    attn_out = jnp.dot(ctx.reshape(bt * S, E).astype(jnp.bfloat16), wo_ref[0],
                       preferred_element_type=jnp.float32) + bo

    def layernorm(y, g, b):                 # f32 VPU/EUP path (PyTorch eps=1e-5)
        mean = jnp.mean(y, axis=-1, keepdims=True)
        cent = y - mean
        var = jnp.mean(cent * cent, axis=-1, keepdims=True)
        return cent * jax.lax.rsqrt(var + 1e-5) * g + b

    # post-norm (norm_first=False, PyTorch default)
    x1 = layernorm(x + attn_out, ln1g, ln1b)

    # --- feed-forward (ReLU, hidden = 4*E) ---
    h1 = jnp.dot(x1.astype(jnp.bfloat16), w1_ref[0],
                 preferred_element_type=jnp.float32) + b1
    h1 = jnp.maximum(h1, 0.0)
    ffn = jnp.dot(h1.astype(jnp.bfloat16), w2_ref[0],
                  preferred_element_type=jnp.float32) + b2

    out_ref[...] = layernorm(x1 + ffn, ln2g, ln2b).reshape(bt, S, E)


# ---------------------------------------------------------------------------
# Wrapper
# ---------------------------------------------------------------------------

def _num_tensorcores():
    """Best-effort TensorCore count (1 on v5e/v6e, 2 on v7x); never raises."""
    try:
        info = pltpu.get_tpu_info()
        for name in ("num_cores", "core_count", "num_tensorcores",
                     "tensorcore_count", "cores_per_chip"):
            n = getattr(info, name, None)
            if n:
                return int(n)
    except Exception:
        pass
    try:
        kind = jax.devices()[0].device_kind.lower()
        if any(tag in kind for tag in ("v7", "v5p", "v4")):
            return 2
    except Exception:
        pass
    return 1


def bert_forward(seq_ids, seg_ids, tok_table, seg_table, pos_enc, params, num_heads,
                 *, batch_tile=None):
    B, S = seq_ids.shape
    E = tok_table.shape[1]
    # PositionalEncoding in the reference broadcasts (B,S,E) + (1,max_len,E): needs S == max_len.
    assert pos_enc.shape[1] == S, "PositionalEncoding broadcast requires seq_len == max_len"

    # Embedding gathers + combine are plain-XLA glue; fuses into the gather epilogue.
    tok_e = jnp.take(tok_table, seq_ids, axis=0)          # (B, S, E) f32
    seg_e = jnp.take(seg_table, seg_ids, axis=0)          # (B, S, E) f32
    # Reference quirk (faithful): combined = tok + seg + (tok + pos_enc) = 2*tok + seg + pos_enc
    combined = 2.0 * tok_e + seg_e + pos_enc              # (B, S, E) f32

    if batch_tile is None:
        # Split the batch only when >=2 TensorCores can consume the 'parallel' axis;
        # on single-TC chips (v5e/v6e) a split just doubles step count and weight traffic.
        if _num_tensorcores() >= 2 and B >= 2 and B % 2 == 0:
            batch_tile = B // 2
        else:
            batch_tile = B
    assert B % batch_tile == 0
    nbt = B // batch_tile

    wqkv, wo, w1, w2, vec = (params["wqkv"], params["wo"], params["w1"],
                             params["w2"], params["vec"])
    L = wqkv.shape[0]
    F = w1.shape[-1]
    M = B * S

    # Advisory cost estimate (helps XLA schedule the gathers around the custom call).
    flops_layer = (2 * M * E * 3 * E                 # fused QKV
                   + num_heads * 4 * B * S * S * E   # scores + context (masked full-E)
                   + 2 * M * E * E                   # output projection
                   + 2 * M * E * F + 2 * M * F * E)  # FFN
    cost = pl.CostEstimate(
        flops=int(L * flops_layer),
        transcendentals=int(L * B * num_heads * S * S),
        bytes_accessed=int(L * (2 * (wqkv.size + wo.size + w1.size + w2.size)
                                + 4 * vec.size)
                           + 2 * 4 * combined.size))

    out = pl.pallas_call(
        functools.partial(bert_stack_kernel, num_heads=num_heads),
        out_shape=jax.ShapeDtypeStruct((B, S, E), jnp.float32),
        grid=(nbt, L),
        in_specs=[
            # index_map ignores l -> fetched once per batch tile, not per layer step.
            pl.BlockSpec((batch_tile, S, E), lambda b, l: (b, 0, 0)),
            pl.BlockSpec((1, E, 3 * E), lambda b, l: (l, 0, 0)),
            pl.BlockSpec((1, E, E), lambda b, l: (l, 0, 0)),
            pl.BlockSpec((1, E, F), lambda b, l: (l, 0, 0)),
            pl.BlockSpec((1, F, E), lambda b, l: (l, 0, 0)),
            pl.BlockSpec((1, 8, F), lambda b, l: (l, 0, 0)),
        ],
        out_specs=pl.BlockSpec((batch_tile, S, E), lambda b, l: (b, 0, 0)),
        compiler_params=pltpu.CompilerParams(
            dimension_semantics=("parallel", "arbitrary"),
            vmem_limit_bytes=32 * 1024 * 1024),
        cost_estimate=cost,
    )(combined, wqkv, wo, w1, w2, vec)
    return out


# ---------------------------------------------------------------------------
# Parameter construction (stacked over layers; matmul weights bf16, vectors packed)
# ---------------------------------------------------------------------------

def make_positional_encoding(embed_size, max_len):
    position = jnp.arange(max_len, dtype=jnp.float32)[:, None]
    div_term = jnp.exp(jnp.arange(0, embed_size, 2, dtype=jnp.float32)
                       * -(jnp.log(jnp.float32(10000.0)) / embed_size))
    ang = position * div_term
    enc = jnp.zeros((max_len, embed_size), dtype=jnp.float32)
    enc = enc.at[:, 0::2].set(jnp.sin(ang))
    enc = enc.at[:, 1::2].set(jnp.cos(ang))
    return enc[None]            # (1, max_len, embed_size)


_VEC_ROWS = ("bqkv", "bo", "ln1_g", "ln1_b", "b1", "b2", "ln2_g", "ln2_b")


def pack_layer_vectors(vectors, n_layers, ffn_dim):
    """Pack the per-layer bias / LayerNorm vectors into one (L, 8, F) f32 slab."""
    slab = jnp.zeros((n_layers, len(_VEC_ROWS), ffn_dim), jnp.float32)
    for r, name in enumerate(_VEC_ROWS):
        v = vectors[name]
        slab = slab.at[:, r, :v.shape[-1]].set(v)
    return slab


def init_stacked_params(key, n_layers, embed_dim):
    E = embed_dim
    F = 4 * E
    std = 0.02
    ks = jax.random.split(key, 6)

    def w(k, shape):
        # MXU operands stored bf16 (halves weight traffic); f32 accumulation in-kernel.
        return (jax.random.normal(k, (n_layers,) + shape, jnp.float32) * std
                ).astype(jnp.bfloat16)

    wq, wk, wv = w(ks[0], (E, E)), w(ks[1], (E, E)), w(ks[2], (E, E))
    vectors = {
        "bqkv": jnp.zeros((n_layers, 3 * E), jnp.float32),
        "bo": jnp.zeros((n_layers, E), jnp.float32),
        "ln1_g": jnp.ones((n_layers, E), jnp.float32),
        "ln1_b": jnp.zeros((n_layers, E), jnp.float32),
        "b1": jnp.zeros((n_layers, F), jnp.float32),
        "b2": jnp.zeros((n_layers, E), jnp.float32),
        "ln2_g": jnp.ones((n_layers, E), jnp.float32),
        "ln2_b": jnp.zeros((n_layers, E), jnp.float32),
    }
    return {
        "wqkv": jnp.concatenate([wq, wk, wv], axis=-1),   # (L, E, 3E) bf16
        "wo": w(ks[3], (E, E)),
        "w1": w(ks[4], (E, F)),
        "w2": w(ks[5], (F, E)),
        "vec": pack_layer_vectors(vectors, n_layers, F),  # (L, 8, F) f32
    }


# ---------------------------------------------------------------------------
# Main
# ---------------------------------------------------------------------------

if __name__ == "__main__":
    # small config consistent with the module
    vocab_size, n_segments, max_len = 50, 2, 8
    embed_dim, n_layers, attn_heads = 32, 2, 4
    B, S = 2, max_len              # S must equal max_len (PositionalEncoding broadcast)

    key = jax.random.PRNGKey(0)
    k_tok, k_seg, k_seq, k_sg, k_layers = jax.random.split(key, 5)

    tok_table = jax.random.normal(k_tok, (vocab_size, embed_dim), jnp.float32) * 0.02
    seg_table = jax.random.normal(k_seg, (n_segments, embed_dim), jnp.float32) * 0.02
    pos_enc = make_positional_encoding(embed_dim, max_len)

    stacked_params = init_stacked_params(k_layers, n_layers, embed_dim)

    seq_ids = jax.random.randint(k_seq, (B, S), 0, vocab_size, dtype=jnp.int32)
    seg_ids = jax.random.randint(k_sg, (B, S), 0, n_segments, dtype=jnp.int32)

    out = bert_forward(seq_ids, seg_ids, tok_table, seg_table, pos_enc,
                       stacked_params, attn_heads)
    out = jax.block_until_ready(out)
    assert out.shape == (B, S, embed_dim)
    assert bool(jnp.all(jnp.isfinite(out)))
    print("KERNEL_OK")
</pallas_src>

<mosaic_0001>
module attributes {stable_mosaic.version = 11 : i64} {
  func.func @bert_stack_kernel(%arg0: i32, %arg1: i32, %arg2: memref<2x8x32xf32, #tpu.memory_space<vmem>>, %arg3: memref<1x32x96xbf16, #tpu.memory_space<vmem>>, %arg4: memref<1x32x32xbf16, #tpu.memory_space<vmem>>, %arg5: memref<1x32x128xbf16, #tpu.memory_space<vmem>>, %arg6: memref<1x128x32xbf16, #tpu.memory_space<vmem>>, %arg7: memref<1x8x128xf32, #tpu.memory_space<vmem>>, %arg8: memref<2x8x32xf32, #tpu.memory_space<vmem>>) attributes {dimension_semantics = [#tpu.dimension_semantics<parallel>, #tpu.dimension_semantics<arbitrary>], iteration_bounds = array<i64: 1, 2>, scalar_prefetch = 0 : i64, scratch_operands = 0 : i64, tpu.core_type = #tpu.core_type<tc>, window_params = [{transform_indices = @transform_0, window_bounds = array<i64: 2, 8, 32>}, {transform_indices = @transform_1, window_bounds = array<i64: 1, 32, 96>}, {transform_indices = @transform_2, window_bounds = array<i64: 1, 32, 32>}, {transform_indices = @transform_3, window_bounds = array<i64: 1, 32, 128>}, {transform_indices = @transform_4, window_bounds = array<i64: 1, 128, 32>}, {transform_indices = @transform_5, window_bounds = array<i64: 1, 8, 128>}, {transform_indices = @transform_6, window_bounds = array<i64: 2, 8, 32>}]} {
    %c0_i32 = arith.constant 0 : i32
    %0 = arith.cmpi eq, %arg1, %c0_i32 : i32
    %1 = arith.extui %0 : i1 to i32
    %c0_i32_0 = arith.constant 0 : i32
    %2 = arith.cmpi ne, %1, %c0_i32_0 : i32
    scf.if %2 {
      %c0_60 = arith.constant 0 : index
      %c0_61 = arith.constant 0 : index
      %c0_62 = arith.constant 0 : index
      %232 = vector.load %arg2[%c0_60, %c0_61, %c0_62] : memref<2x8x32xf32, #tpu.memory_space<vmem>>, vector<2x8x32xf32>
      %c0_63 = arith.constant 0 : index
      %c0_64 = arith.constant 0 : index
      %c0_65 = arith.constant 0 : index
      %233 = vector.load %arg8[%c0_63, %c0_64, %c0_65] : memref<2x8x32xf32, #tpu.memory_space<vmem>>, vector<2x8x32xf32>
      tpu.vector_store %arg8[%c0_63, %c0_64, %c0_65], %232 {strides = array<i32>} : memref<2x8x32xf32, #tpu.memory_space<vmem>>, vector<2x8x32xf32>,
    } else {
    }
    %c0 = arith.constant 0 : index
    %c0_1 = arith.constant 0 : index
    %c0_2 = arith.constant 0 : index
    %3 = vector.load %arg8[%c0, %c0_1, %c0_2] : memref<2x8x32xf32, #tpu.memory_space<vmem>>, vector<2x8x32xf32>
    %c0_3 = arith.constant 0 : index
    %c0_4 = arith.constant 0 : index
    %c0_5 = arith.constant 0 : index
    %4 = vector.load %arg7[%c0_3, %c0_4, %c0_5] : memref<1x8x128xf32, #tpu.memory_space<vmem>>, vector<1x8x128xf32>
    %5 = vector.shape_cast %4 : vector<1x8x128xf32> to vector<8x128xf32>
    %6 = vector.extract_strided_slice %5 {offsets = [0, 0], sizes = [1, 96], strides = [1, 1]} : vector<8x128xf32> to vector<1x96xf32>
    %7 = vector.shape_cast %6 : vector<1x96xf32> to vector<96xf32>
    %8 = vector.extract_strided_slice %5 {offsets = [1, 0], sizes = [1, 32], strides = [1, 1]} : vector<8x128xf32> to vector<1x32xf32>
    %9 = vector.shape_cast %8 : vector<1x32xf32> to vector<32xf32>
    %10 = vector.extract_strided_slice %5 {offsets = [2, 0], sizes = [1, 32], strides = [1, 1]} : vector<8x128xf32> to vector<1x32xf32>
    %11 = vector.shape_cast %10 : vector<1x32xf32> to vector<32xf32>
    %12 = vector.extract_strided_slice %5 {offsets = [3, 0], sizes = [1, 32], strides = [1, 1]} : vector<8x128xf32> to vector<1x32xf32>
    %13 = vector.shape_cast %12 : vector<1x32xf32> to vector<32xf32>
    %14 = vector.extract_strided_slice %5 {offsets = [4, 0], sizes = [1, 128], strides = [1, 1]} : vector<8x128xf32> to vector<1x128xf32>
    %15 = vector.shape_cast %14 : vector<1x128xf32> to vector<128xf32>
    %16 = vector.extract_strided_slice %5 {offsets = [5, 0], sizes = [1, 32], strides = [1, 1]} : vector<8x128xf32> to vector<1x32xf32>
    %17 = vector.shape_cast %16 : vector<1x32xf32> to vector<32xf32>
    %18 = vector.extract_strided_slice %5 {offsets = [6, 0], sizes = [1, 32], strides = [1, 1]} : vector<8x128xf32> to vector<1x32xf32>
    %19 = vector.shape_cast %18 : vector<1x32xf32> to vector<32xf32>
    %20 = vector.extract_strided_slice %5 {offsets = [7, 0], sizes = [1, 32], strides = [1, 1]} : vector<8x128xf32> to vector<1x32xf32>
    %21 = vector.shape_cast %20 : vector<1x32xf32> to vector<32xf32>
    %22 = vector.shape_cast %3 : vector<2x8x32xf32> to vector<16x32xf32>
    %23 = arith.truncf %22 : vector<16x32xf32> to vector<16x32xbf16>
    %c0_6 = arith.constant 0 : index
    %c0_7 = arith.constant 0 : index
    %c0_8 = arith.constant 0 : index
    %24 = vector.load %arg3[%c0_6, %c0_7, %c0_8] : memref<1x32x96xbf16, #tpu.memory_space<vmem>>, vector<1x32x96xbf16>
    %25 = vector.shape_cast %24 : vector<1x32x96xbf16> to vector<32x96xbf16>
    %cst = arith.constant dense<0.000000e+00> : vector<16x96xf32>
    %26 = tpu.matmul %23, %25, %cst {dimension_numbers = #tpu.dot_dimension_numbers<[1], [0], [0], [1], [0, 0, 1, 1], [], []>} : vector<16x32xbf16>, vector<32x96xbf16>, vector<16x96xf32> -> vector<16x96xf32>
    %27 = vector.shape_cast %7 : vector<96xf32> to vector<1x96xf32>
    %28 = vector.broadcast %27 : vector<1x96xf32> to vector<16x96xf32>
    %29 = arith.addf %26, %28 : vector<16x96xf32>
    %30 = vector.extract_strided_slice %29 {offsets = [0, 0], sizes = [16, 32], strides = [1, 1]} : vector<16x96xf32> to vector<16x32xf32>
    %31 = vector.shape_cast %30 : vector<16x32xf32> to vector<2x8x32xf32>
    %32 = vector.extract_strided_slice %29 {offsets = [0, 32], sizes = [16, 32], strides = [1, 1]} : vector<16x96xf32> to vector<16x32xf32>
    %33 = arith.truncf %32 : vector<16x32xf32> to vector<16x32xbf16>
    %34 = vector.shape_cast %33 : vector<16x32xbf16> to vector<2x8x32xbf16>
    %35 = vector.extract_strided_slice %29 {offsets = [0, 64], sizes = [16, 32], strides = [1, 1]} : vector<16x96xf32> to vector<16x32xf32>
    %36 = arith.truncf %35 : vector<16x32xf32> to vector<16x32xbf16>
    %37 = vector.shape_cast %36 : vector<16x32xbf16> to vector<2x8x32xbf16>
    %38 = tpu.iota {dimensions = array<i32: 1>} : vector<1x32xi32>
    %cst_9 = arith.constant 0.000000e+00 : f32
    %39 = vector.broadcast %cst_9 : f32 to vector<2x8x32xf32>
    %c0_i32_10 = arith.constant 0 : i32
    %40 = vector.broadcast %c0_i32_10 : i32 to vector<1x32xi32>
    %41 = arith.cmpi sge, %38, %40 : vector<1x32xi32>
    %c8_i32 = arith.constant 8 : i32
    %42 = vector.broadcast %c8_i32 : i32 to vector<1x32xi32>
    %43 = arith.cmpi slt, %38, %42 : vector<1x32xi32>
    %44 = arith.andi %41, %43 : vector<1x32xi1>
    %45 = arith.extui %44 : vector<1x32xi1> to vector<1x32xi32>
    %46 = arith.sitofp %45 : vector<1x32xi32> to vector<1x32xf32>
    %47 = vector.shape_cast %46 : vector<1x32xf32> to vector<1x1x32xf32>
    %48 = vector.broadcast %47 : vector<1x1x32xf32> to vector<2x8x32xf32>
    %49 = arith.mulf %31, %48 : vector<2x8x32xf32>
    %50 = arith.truncf %49 : vector<2x8x32xf32> to vector<2x8x32xbf16>
    "tpu.trace_start"() <{level = 10 : i32, message = "bqd,bkd->bqk"}> : () -> ()
    %cst_11 = arith.constant dense<0.000000e+00> : vector<2x8x8xf32>
    %51 = tpu.matmul %50, %34, %cst_11 {dimension_numbers = #tpu.dot_dimension_numbers<[2], [2], [1], [1], [0, 0, 0, 1, 1, 1], [0], [0]>} : vector<2x8x32xbf16>, vector<2x8x32xbf16>, vector<2x8x8xf32> -> vector<2x8x8xf32>
    "tpu.trace_stop"() : () -> ()
    %cst_12 = arith.constant 0.353553385 : f32
    %52 = vector.broadcast %cst_12 : f32 to vector<2x8x8xf32>
    %53 = arith.mulf %51, %52 : vector<2x8x8xf32>
    %cst_13 = arith.constant dense<0xFF800000> : vector<2x8xf32>
    %54 = vector.multi_reduction <maximumf>, %53, %cst_13 [2] : vector<2x8x8xf32> to vector<2x8xf32>
    %55 = vector.shape_cast %54 : vector<2x8xf32> to vector<2x8x1xf32>
    %56 = vector.broadcast %55 : vector<2x8x1xf32> to vector<2x8x8xf32>
    %57 = arith.subf %53, %56 : vector<2x8x8xf32>
    %58 = math.exp %57 : vector<2x8x8xf32>
    %cst_14 = arith.constant dense<0.000000e+00> : vector<2x8xf32>
    %59 = vector.multi_reduction <add>, %58, %cst_14 [2] : vector<2x8x8xf32> to vector<2x8xf32>
    %60 = vector.shape_cast %59 : vector<2x8xf32> to vector<2x8x1xf32>
    %61 = tpu.reciprocal %60 {approx = true} : vector<2x8x1xf32> -> vector<2x8x1xf32>
    %62 = vector.broadcast %61 : vector<2x8x1xf32> to vector<2x8x8xf32>
    %63 = arith.mulf %58, %62 : vector<2x8x8xf32>
    %64 = arith.truncf %63 : vector<2x8x8xf32> to vector<2x8x8xbf16>
    "tpu.trace_start"() <{level = 10 : i32, message = "bqk,bkd->bqd"}> : () -> ()
    %cst_15 = arith.constant dense<0.000000e+00> : vector<2x8x32xf32>
    %65 = tpu.matmul %64, %37, %cst_15 {dimension_numbers = #tpu.dot_dimension_numbers<[2], [1], [1], [2], [0, 0, 0, 1, 1, 2], [0], [0]>} : vector<2x8x8xbf16>, vector<2x8x32xbf16>, vector<2x8x32xf32> -> vector<2x8x32xf32>
    "tpu.trace_stop"() : () -> ()
    %66 = vector.shape_cast %46 : vector<1x32xf32> to vector<1x1x32xf32>
    %67 = vector.broadcast %66 : vector<1x1x32xf32> to vector<2x8x32xf32>
    %68 = arith.mulf %65, %67 : vector<2x8x32xf32>
    %69 = arith.addf %39, %68 : vector<2x8x32xf32>
    %c8_i32_16 = arith.constant 8 : i32
    %70 = vector.broadcast %c8_i32_16 : i32 to vector<1x32xi32>
    %71 = arith.cmpi sge, %38, %70 : vector<1x32xi32>
    %c16_i32 = arith.constant 16 : i32
    %72 = vector.broadcast %c16_i32 : i32 to vector<1x32xi32>
    %73 = arith.cmpi slt, %38, %72 : vector<1x32xi32>
    %74 = arith.andi %71, %73 : vector<1x32xi1>
    %75 = arith.extui %74 : vector<1x32xi1> to vector<1x32xi32>
    %76 = arith.sitofp %75 : vector<1x32xi32> to vector<1x32xf32>
    %77 = vector.shape_cast %76 : vector<1x32xf32> to vector<1x1x32xf32>
    %78 = vector.broadcast %77 : vector<1x1x32xf32> to vector<2x8x32xf32>
    %79 = arith.mulf %31, %78 : vector<2x8x32xf32>
    %80 = arith.truncf %79 : vector<2x8x32xf32> to vector<2x8x32xbf16>
    "tpu.trace_start"() <{level = 10 : i32, message = "bqd,bkd->bqk"}> : () -> ()
    %cst_17 = arith.constant dense<0.000000e+00> : vector<2x8x8xf32>
    %81 = tpu.matmul %80, %34, %cst_17 {dimension_numbers = #tpu.dot_dimension_numbers<[2], [2], [1], [1], [0, 0, 0, 1, 1, 1], [0], [0]>} : vector<2x8x32xbf16>, vector<2x8x32xbf16>, vector<2x8x8xf32> -> vector<2x8x8xf32>
    "tpu.trace_stop"() : () -> ()
    %cst_18 = arith.constant 0.353553385 : f32
    %82 = vector.broadcast %cst_18 : f32 to vector<2x8x8xf32>
    %83 = arith.mulf %81, %82 : vector<2x8x8xf32>
    %cst_19 = arith.constant dense<0xFF800000> : vector<2x8xf32>
    %84 = vector.multi_reduction <maximumf>, %83, %cst_19 [2] : vector<2x8x8xf32> to vector<2x8xf32>
    %85 = vector.shape_cast %84 : vector<2x8xf32> to vector<2x8x1xf32>
    %86 = vector.broadcast %85 : vector<2x8x1xf32> to vector<2x8x8xf32>
    %87 = arith.subf %83, %86 : vector<2x8x8xf32>
    %88 = math.exp %87 : vector<2x8x8xf32>
    %cst_20 = arith.constant dense<0.000000e+00> : vector<2x8xf32>
    %89 = vector.multi_reduction <add>, %88, %cst_20 [2] : vector<2x8x8xf32> to vector<2x8xf32>
    %90 = vector.shape_cast %89 : vector<2x8xf32> to vector<2x8x1xf32>
    %91 = tpu.reciprocal %90 {approx = true} : vector<2x8x1xf32> -> vector<2x8x1xf32>
    %92 = vector.broadcast %91 : vector<2x8x1xf32> to vector<2x8x8xf32>
    %93 = arith.mulf %88, %92 : vector<2x8x8xf32>
    %94 = arith.truncf %93 : vector<2x8x8xf32> to vector<2x8x8xbf16>
    "tpu.trace_start"() <{level = 10 : i32, message = "bqk,bkd->bqd"}> : () -> ()
    %cst_21 = arith.constant dense<0.000000e+00> : vector<2x8x32xf32>
    %95 = tpu.matmul %94, %37, %cst_21 {dimension_numbers = #tpu.dot_dimension_numbers<[2], [1], [1], [2], [0, 0, 0, 1, 1, 2], [0], [0]>} : vector<2x8x8xbf16>, vector<2x8x32xbf16>, vector<2x8x32xf32> -> vector<2x8x32xf32>
    "tpu.trace_stop"() : () -> ()
    %96 = vector.shape_cast %76 : vector<1x32xf32> to vector<1x1x32xf32>
    %97 = vector.broadcast %96 : vector<1x1x32xf32> to vector<2x8x32xf32>
    %98 = arith.mulf %95, %97 : vector<2x8x32xf32>
    %99 = arith.addf %69, %98 : vector<2x8x32xf32>
    %c16_i32_22 = arith.constant 16 : i32
    %100 = vector.broadcast %c16_i32_22 : i32 to vector<1x32xi32>
    %101 = arith.cmpi sge, %38, %100 : vector<1x32xi32>
    %c24_i32 = arith.constant 24 : i32
    %102 = vector.broadcast %c24_i32 : i32 to vector<1x32xi32>
    %103 = arith.cmpi slt, %38, %102 : vector<1x32xi32>
    %104 = arith.andi %101, %103 : vector<1x32xi1>
    %105 = arith.extui %104 : vector<1x32xi1> to vector<1x32xi32>
    %106 = arith.sitofp %105 : vector<1x32xi32> to vector<1x32xf32>
    %107 = vector.shape_cast %106 : vector<1x32xf32> to vector<1x1x32xf32>
    %108 = vector.broadcast %107 : vector<1x1x32xf32> to vector<2x8x32xf32>
    %109 = arith.mulf %31, %108 : vector<2x8x32xf32>
    %110 = arith.truncf %109 : vector<2x8x32xf32> to vector<2x8x32xbf16>
    "tpu.trace_start"() <{level = 10 : i32, message = "bqd,bkd->bqk"}> : () -> ()
    %cst_23 = arith.constant dense<0.000000e+00> : vector<2x8x8xf32>
    %111 = tpu.matmul %110, %34, %cst_23 {dimension_numbers = #tpu.dot_dimension_numbers<[2], [2], [1], [1], [0, 0, 0, 1, 1, 1], [0], [0]>} : vector<2x8x32xbf16>, vector<2x8x32xbf16>, vector<2x8x8xf32> -> vector<2x8x8xf32>
    "tpu.trace_stop"() : () -> ()
    %cst_24 = arith.constant 0.353553385 : f32
    %112 = vector.broadcast %cst_24 : f32 to vector<2x8x8xf32>
    %113 = arith.mulf %111, %112 : vector<2x8x8xf32>
    %cst_25 = arith.constant dense<0xFF800000> : vector<2x8xf32>
    %114 = vector.multi_reduction <maximumf>, %113, %cst_25 [2] : vector<2x8x8xf32> to vector<2x8xf32>
    %115 = vector.shape_cast %114 : vector<2x8xf32> to vector<2x8x1xf32>
    %116 = vector.broadcast %115 : vector<2x8x1xf32> to vector<2x8x8xf32>
    %117 = arith.subf %113, %116 : vector<2x8x8xf32>
    %118 = math.exp %117 : vector<2x8x8xf32>
    %cst_26 = arith.constant dense<0.000000e+00> : vector<2x8xf32>
    %119 = vector.multi_reduction <add>, %118, %cst_26 [2] : vector<2x8x8xf32> to vector<2x8xf32>
    %120 = vector.shape_cast %119 : vector<2x8xf32> to vector<2x8x1xf32>
    %121 = tpu.reciprocal %120 {approx = true} : vector<2x8x1xf32> -> vector<2x8x1xf32>
    %122 = vector.broadcast %121 : vector<2x8x1xf32> to vector<2x8x8xf32>
    %123 = arith.mulf %118, %122 : vector<2x8x8xf32>
    %124 = arith.truncf %123 : vector<2x8x8xf32> to vector<2x8x8xbf16>
    "tpu.trace_start"() <{level = 10 : i32, message = "bqk,bkd->bqd"}> : () -> ()
    %cst_27 = arith.constant dense<0.000000e+00> : vector<2x8x32xf32>
    %125 = tpu.matmul %124, %37, %cst_27 {dimension_numbers = #tpu.dot_dimension_numbers<[2], [1], [1], [2], [0, 0, 0, 1, 1, 2], [0], [0]>} : vector<2x8x8xbf16>, vector<2x8x32xbf16>, vector<2x8x32xf32> -> vector<2x8x32xf32>
    "tpu.trace_stop"() : () -> ()
    %126 = vector.shape_cast %106 : vector<1x32xf32> to vector<1x1x32xf32>
    %127 = vector.broadcast %126 : vector<1x1x32xf32> to vector<2x8x32xf32>
    %128 = arith.mulf %125, %127 : vector<2x8x32xf32>
    %129 = arith.addf %99, %128 : vector<2x8x32xf32>
    %c24_i32_28 = arith.constant 24 : i32
    %130 = vector.broadcast %c24_i32_28 : i32 to vector<1x32xi32>
    %131 = arith.cmpi sge, %38, %130 : vector<1x32xi32>
    %c32_i32 = arith.constant 32 : i32
    %132 = vector.broadcast %c32_i32 : i32 to vector<1x32xi32>
    %133 = arith.cmpi slt, %38, %132 : vector<1x32xi32>
    %134 = arith.andi %131, %133 : vector<1x32xi1>
    %135 = arith.extui %134 : vector<1x32xi1> to vector<1x32xi32>
    %136 = arith.sitofp %135 : vector<1x32xi32> to vector<1x32xf32>
    %137 = vector.shape_cast %136 : vector<1x32xf32> to vector<1x1x32xf32>
    %138 = vector.broadcast %137 : vector<1x1x32xf32> to vector<2x8x32xf32>
    %139 = arith.mulf %31, %138 : vector<2x8x32xf32>
    %140 = arith.truncf %139 : vector<2x8x32xf32> to vector<2x8x32xbf16>
    "tpu.trace_start"() <{level = 10 : i32, message = "bqd,bkd->bqk"}> : () -> ()
    %cst_29 = arith.constant dense<0.000000e+00> : vector<2x8x8xf32>
    %141 = tpu.matmul %140, %34, %cst_29 {dimension_numbers = #tpu.dot_dimension_numbers<[2], [2], [1], [1], [0, 0, 0, 1, 1, 1], [0], [0]>} : vector<2x8x32xbf16>, vector<2x8x32xbf16>, vector<2x8x8xf32> -> vector<2x8x8xf32>
    "tpu.trace_stop"() : () -> ()
    %cst_30 = arith.constant 0.353553385 : f32
    %142 = vector.broadcast %cst_30 : f32 to vector<2x8x8xf32>
    %143 = arith.mulf %141, %142 : vector<2x8x8xf32>
    %cst_31 = arith.constant dense<0xFF800000> : vector<2x8xf32>
    %144 = vector.multi_reduction <maximumf>, %143, %cst_31 [2] : vector<2x8x8xf32> to vector<2x8xf32>
    %145 = vector.shape_cast %144 : vector<2x8xf32> to vector<2x8x1xf32>
    %146 = vector.broadcast %145 : vector<2x8x1xf32> to vector<2x8x8xf32>
    %147 = arith.subf %143, %146 : vector<2x8x8xf32>
    %148 = math.exp %147 : vector<2x8x8xf32>
    %cst_32 = arith.constant dense<0.000000e+00> : vector<2x8xf32>
    %149 = vector.multi_reduction <add>, %148, %cst_32 [2] : vector<2x8x8xf32> to vector<2x8xf32>
    %150 = vector.shape_cast %149 : vector<2x8xf32> to vector<2x8x1xf32>
    %151 = tpu.reciprocal %150 {approx = true} : vector<2x8x1xf32> -> vector<2x8x1xf32>
    %152 = vector.broadcast %151 : vector<2x8x1xf32> to vector<2x8x8xf32>
    %153 = arith.mulf %148, %152 : vector<2x8x8xf32>
    %154 = arith.truncf %153 : vector<2x8x8xf32> to vector<2x8x8xbf16>
    "tpu.trace_start"() <{level = 10 : i32, message = "bqk,bkd->bqd"}> : () -> ()
    %cst_33 = arith.constant dense<0.000000e+00> : vector<2x8x32xf32>
    %155 = tpu.matmul %154, %37, %cst_33 {dimension_numbers = #tpu.dot_dimension_numbers<[2], [1], [1], [2], [0, 0, 0, 1, 1, 2], [0], [0]>} : vector<2x8x8xbf16>, vector<2x8x32xbf16>, vector<2x8x32xf32> -> vector<2x8x32xf32>
    "tpu.trace_stop"() : () -> ()
    %156 = vector.shape_cast %136 : vector<1x32xf32> to vector<1x1x32xf32>
    %157 = vector.broadcast %156 : vector<1x1x32xf32> to vector<2x8x32xf32>
    %158 = arith.mulf %155, %157 : vector<2x8x32xf32>
    %159 = arith.addf %129, %158 : vector<2x8x32xf32>
    %160 = vector.shape_cast %159 : vector<2x8x32xf32> to vector<16x32xf32>
    %161 = arith.truncf %160 : vector<16x32xf32> to vector<16x32xbf16>
    %c0_34 = arith.constant 0 : index
    %c0_35 = arith.constant 0 : index
    %c0_36 = arith.constant 0 : index
    %162 = vector.load %arg4[%c0_34, %c0_35, %c0_36] : memref<1x32x32xbf16, #tpu.memory_space<vmem>>, vector<1x32x32xbf16>
    %163 = vector.shape_cast %162 : vector<1x32x32xbf16> to vector<32x32xbf16>
    %cst_37 = arith.constant dense<0.000000e+00> : vector<16x32xf32>
    %164 = tpu.matmul %161, %163, %cst_37 {dimension_numbers = #tpu.dot_dimension_numbers<[1], [0], [0], [1], [0, 0, 1, 1], [], []>} : vector<16x32xbf16>, vector<32x32xbf16>, vector<16x32xf32> -> vector<16x32xf32>
    %165 = vector.shape_cast %9 : vector<32xf32> to vector<1x32xf32>
    %166 = vector.broadcast %165 : vector<1x32xf32> to vector<16x32xf32>
    %167 = arith.addf %164, %166 : vector<16x32xf32>
    %168 = arith.addf %22, %167 : vector<16x32xf32>
    %cst_38 = arith.constant dense<0.000000e+00> : vector<16xf32>
    %169 = vector.multi_reduction <add>, %168, %cst_38 [1] : vector<16x32xf32> to vector<16xf32>
    %170 = vector.shape_cast %169 : vector<16xf32> to vector<16x1xf32>
    %cst_39 = arith.constant 3.200000e+01 : f32
    %171 = vector.broadcast %cst_39 : f32 to vector<16x1xf32>
    %172 = arith.divf %170, %171 : vector<16x1xf32>
    %173 = vector.broadcast %172 : vector<16x1xf32> to vector<16x32xf32>
    %174 = arith.subf %168, %173 : vector<16x32xf32>
    %175 = arith.mulf %174, %174 : vector<16x32xf32>
    %cst_40 = arith.constant dense<0.000000e+00> : vector<16xf32>
    %176 = vector.multi_reduction <add>, %175, %cst_40 [1] : vector<16x32xf32> to vector<16xf32>
    %177 = vector.shape_cast %176 : vector<16xf32> to vector<16x1xf32>
    %cst_41 = arith.constant 3.200000e+01 : f32
    %178 = vector.broadcast %cst_41 : f32 to vector<16x1xf32>
    %179 = arith.divf %177, %178 : vector<16x1xf32>
    %cst_42 = arith.constant 9.99999974E-6 : f32
    %180 = vector.broadcast %cst_42 : f32 to vector<16x1xf32>
    %181 = arith.addf %179, %180 : vector<16x1xf32>
    %182 = math.rsqrt %181 : vector<16x1xf32>
    %183 = vector.broadcast %182 : vector<16x1xf32> to vector<16x32xf32>
    %184 = arith.mulf %174, %183 : vector<16x32xf32>
    %185 = vector.shape_cast %11 : vector<32xf32> to vector<1x32xf32>
    %186 = vector.broadcast %185 : vector<1x32xf32> to vector<16x32xf32>
    %187 = arith.mulf %184, %186 : vector<16x32xf32>
    %188 = vector.shape_cast %13 : vector<32xf32> to vector<1x32xf32>
    %189 = vector.broadcast %188 : vector<1x32xf32> to vector<16x32xf32>
    %190 = arith.addf %187, %189 : vector<16x32xf32>
    %191 = arith.truncf %190 : vector<16x32xf32> to vector<16x32xbf16>
    %c0_43 = arith.constant 0 : index
    %c0_44 = arith.constant 0 : index
    %c0_45 = arith.constant 0 : index
    %192 = vector.load %arg5[%c0_43, %c0_44, %c0_45] : memref<1x32x128xbf16, #tpu.memory_space<vmem>>, vector<1x32x128xbf16>
    %193 = vector.shape_cast %192 : vector<1x32x128xbf16> to vector<32x128xbf16>
    %cst_46 = arith.constant dense<0.000000e+00> : vector<16x128xf32>
    %194 = tpu.matmul %191, %193, %cst_46 {dimension_numbers = #tpu.dot_dimension_numbers<[1], [0], [0], [1], [0, 0, 1, 1], [], []>} : vector<16x32xbf16>, vector<32x128xbf16>, vector<16x128xf32> -> vector<16x128xf32>
    %195 = vector.shape_cast %15 : vector<128xf32> to vector<1x128xf32>
    %196 = vector.broadcast %195 : vector<1x128xf32> to vector<16x128xf32>
    %197 = arith.addf %194, %196 : vector<16x128xf32>
    %cst_47 = arith.constant 0.000000e+00 : f32
    %198 = vector.broadcast %cst_47 : f32 to vector<16x128xf32>
    %199 = arith.maximumf %197, %198 : vector<16x128xf32>
    %200 = arith.truncf %199 : vector<16x128xf32> to vector<16x128xbf16>
    %c0_48 = arith.constant 0 : index
    %c0_49 = arith.constant 0 : index
    %c0_50 = arith.constant 0 : index
    %201 = vector.load %arg6[%c0_48, %c0_49, %c0_50] : memref<1x128x32xbf16, #tpu.memory_space<vmem>>, vector<1x128x32xbf16>
    %202 = vector.shape_cast %201 : vector<1x128x32xbf16> to vector<128x32xbf16>
    %cst_51 = arith.constant dense<0.000000e+00> : vector<16x32xf32>
    %203 = tpu.matmul %200, %202, %cst_51 {dimension_numbers = #tpu.dot_dimension_numbers<[1], [0], [0], [1], [0, 0, 1, 1], [], []>} : vector<16x128xbf16>, vector<128x32xbf16>, vector<16x32xf32> -> vector<16x32xf32>
    %204 = vector.shape_cast %17 : vector<32xf32> to vector<1x32xf32>
    %205 = vector.broadcast %204 : vector<1x32xf32> to vector<16x32xf32>
    %206 = arith.addf %203, %205 : vector<16x32xf32>
    %207 = arith.addf %190, %206 : vector<16x32xf32>
    %cst_52 = arith.constant dense<0.000000e+00> : vector<16xf32>
    %208 = vector.multi_reduction <add>, %207, %cst_52 [1] : vector<16x32xf32> to vector<16xf32>
    %209 = vector.shape_cast %208 : vector<16xf32> to vector<16x1xf32>
    %cst_53 = arith.constant 3.200000e+01 : f32
    %210 = vector.broadcast %cst_53 : f32 to vector<16x1xf32>
    %211 = arith.divf %209, %210 : vector<16x1xf32>
    %212 = vector.broadcast %211 : vector<16x1xf32> to vector<16x32xf32>
    %213 = arith.subf %207, %212 : vector<16x32xf32>
    %214 = arith.mulf %213, %213 : vector<16x32xf32>
    %cst_54 = arith.constant dense<0.000000e+00> : vector<16xf32>
    %215 = vector.multi_reduction <add>, %214, %cst_54 [1] : vector<16x32xf32> to vector<16xf32>
    %216 = vector.shape_cast %215 : vector<16xf32> to vector<16x1xf32>
    %cst_55 = arith.constant 3.200000e+01 : f32
    %217 = vector.broadcast %cst_55 : f32 to vector<16x1xf32>
    %218 = arith.divf %216, %217 : vector<16x1xf32>
    %cst_56 = arith.constant 9.99999974E-6 : f32
    %219 = vector.broadcast %cst_56 : f32 to vector<16x1xf32>
    %220 = arith.addf %218, %219 : vector<16x1xf32>
    %221 = math.rsqrt %220 : vector<16x1xf32>
    %222 = vector.broadcast %221 : vector<16x1xf32> to vector<16x32xf32>
    %223 = arith.mulf %213, %222 : vector<16x32xf32>
    %224 = vector.shape_cast %19 : vector<32xf32> to vector<1x32xf32>
    %225 = vector.broadcast %224 : vector<1x32xf32> to vector<16x32xf32>
    %226 = arith.mulf %223, %225 : vector<16x32xf32>
    %227 = vector.shape_cast %21 : vector<32xf32> to vector<1x32xf32>
    %228 = vector.broadcast %227 : vector<1x32xf32> to vector<16x32xf32>
    %229 = arith.addf %226, %228 : vector<16x32xf32>
    %230 = vector.shape_cast %229 : vector<16x32xf32> to vector<2x8x32xf32>
    %c0_57 = arith.constant 0 : index
    %c0_58 = arith.constant 0 : index
    %c0_59 = arith.constant 0 : index
    %231 = vector.load %arg8[%c0_57, %c0_58, %c0_59] : memref<2x8x32xf32, #tpu.memory_space<vmem>>, vector<2x8x32xf32>
    tpu.vector_store %arg8[%c0_57, %c0_58, %c0_59], %230 {strides = array<i32>} : memref<2x8x32xf32, #tpu.memory_space<vmem>>, vector<2x8x32xf32>,
    return
  }
  func.func @transform_0(%arg0: i32, %arg1: i32) -> (i32, i32, i32) {
    %c0_i32 = arith.constant 0 : i32
    %c0_i32_0 = arith.constant 0 : i32
    %c0_i32_1 = arith.constant 0 : i32
    return %arg0, %c0_i32, %c0_i32_0 : i32, i32, i32
  }
  func.func @transform_1(%arg0: i32, %arg1: i32) -> (i32, i32, i32) {
    %c0_i32 = arith.constant 0 : i32
    %c0_i32_0 = arith.constant 0 : i32
    %c0_i32_1 = arith.constant 0 : i32
    return %arg1, %c0_i32, %c0_i32_0 : i32, i32, i32
  }
  func.func @transform_2(%arg0: i32, %arg1: i32) -> (i32, i32, i32) {
    %c0_i32 = arith.constant 0 : i32
    %c0_i32_0 = arith.constant 0 : i32
    %c0_i32_1 = arith.constant 0 : i32
    return %arg1, %c0_i32, %c0_i32_0 : i32, i32, i32
  }
  func.func @transform_3(%arg0: i32, %arg1: i32) -> (i32, i32, i32) {
    %c0_i32 = arith.constant 0 : i32
    %c0_i32_0 = arith.constant 0 : i32
    %c0_i32_1 = arith.constant 0 : i32
    return %arg1, %c0_i32, %c0_i32_0 : i32, i32, i32
  }
  func.func @transform_4(%arg0: i32, %arg1: i32) -> (i32, i32, i32) {
    %c0_i32 = arith.constant 0 : i32
    %c0_i32_0 = arith.constant 0 : i32
    %c0_i32_1 = arith.constant 0 : i32
    return %arg1, %c0_i32, %c0_i32_0 : i32, i32, i32
  }
  func.func @transform_5(%arg0: i32, %arg1: i32) -> (i32, i32, i32) {
    %c0_i32 = arith.constant 0 : i32
    %c0_i32_0 = arith.constant 0 : i32
    %c0_i32_1 = arith.constant 0 : i32
    return %arg1, %c0_i32, %c0_i32_0 : i32, i32, i32
  }
  func.func @transform_6(%arg0: i32, %arg1: i32) -> (i32, i32, i32) {
    %c0_i32 = arith.constant 0 : i32
    %c0_i32_0 = arith.constant 0 : i32
    %c0_i32_1 = arith.constant 0 : i32
    return %arg0, %c0_i32, %c0_i32_0 : i32, i32, i32
  }
}

</mosaic_0001>

<llo_original>
// kernel: tpu_custom_call.1
$region0: #{tpu_custom_call.1}
  #allocation0 [shape = 'u32[]', space=smem, size = 0x4, offset = 0x4, fixed_abs, tag = 'smem constant byte address 0x4 - core index']
  #allocation1 [shape = 'u32[144,128]{1,0:T(1,128)}', space=vmem, size = 0x12000, scoped, tag = 'internal scratch']
  %s0 = inlined_call_operand.vmem [shape: f32[2,8,32], index: 0, kind: input, shape index: {}]
  %s1 = inlined_call_operand.vmem [shape: bf16[2,32,96], index: 1, kind: input, shape index: {}]
  %s2 = inlined_call_operand.vmem [shape: bf16[2,32,32], index: 2, kind: input, shape index: {}]
  %s3 = inlined_call_operand.vmem [shape: bf16[2,32,128], index: 3, kind: input, shape index: {}]
  %s4 = inlined_call_operand.vmem [shape: bf16[2,128,32], index: 4, kind: input, shape index: {}]
  %s5 = inlined_call_operand.vmem [shape: f32[2,8,128], index: 5, kind: input, shape index: {}]
  %s6 = inlined_call_operand.hbm [shape: f32[2,8,32], index: 6, kind: output, shape index: {}]
  %s7 = sld [smem:[#allocation0]]
  $region61: #{tpu_custom_call.1} parent=0
    _
  %s9 = ssub.s32 1, %s7
  %s10 = scalar_select 0, %s9, %s7
  $region1: #{tpu_custom_call.1} parent=0
    #allocation2 [shape = 'u8[8192]{0}', space=vmem, size = 0x2000, scoped, tag = 'output window, operand 0, single buffered']
    #allocation3 [shape = 's32[2]{0}', space=sflag, size = 0x8, scoped, tag = 'scoped memory for tpu_custom_call.1']
    %11 = vsyncpa [#allocation3], 0
    loop: start=0, step=1, limit=4
    $region2: #{tpu_custom_call.1} parent=1 // loop_pre_header
      _
    $region3: #{tpu_custom_call.1} parent=1 // loop_header
      %s13 = sphi 0, %s17
      %p14 = scmp.ge.s32.totalorder %s13, 4
      %s20 = sphi 0, %s32
      %s21 = sphi 0, %s28
      %s22 = sphi 0, %s20
      %s23 = sphi 0, %s21
      %s24 = sphi 0, %s22
      %s25 = sphi 0, %s23
      %s35 = sphi 0, %s37
      %s38 = sphi 0, %s35
      %s39 = sphi 0, %s38
      %s55 = sphi 0, %s39
      %s61 = sphi 0, %s63
      %s64 = sphi 0, %s61
      %s65 = sphi 0, %s64
      %s81 = sphi 0, %s65
      %s87 = sphi 0, %s89
      %s90 = sphi 0, %s87
      %s91 = sphi 0, %s90
      %s107 = sphi 0, %s91
      %s113 = sphi 0, %s115
      %s116 = sphi 0, %s113
      %s117 = sphi 0, %s116
      %s133 = sphi 0, %s117
      %s139 = sphi 0, %s141
      %s142 = sphi 0, %s139
      %s143 = sphi 0, %s142
      %s159 = sphi 0, %s143
      %s165 = sphi 0, %s167
      %s168 = sphi 0, %s165
      %s169 = sphi 0, %s168
      %s185 = sphi 0, %s169
      %s191 = sphi 0, %s193
      %s194 = sphi 0, %s191
      %s195 = sphi 0, %s194
      %s211 = sphi 0, %s195
    $region4: #{tpu_custom_call.1} parent=1 // loop_header_branch
      %16 = sbr.rel (%p14) target = $region8
    $region5: #{tpu_custom_call.1} parent=1 // loop_body
      %s18 = ssub.s32 %s13, 1
      %s19 = ssub.s32 %s13, 2
      %s26 = sadd.s32 1, %s21
      %p27 = scmp.ge.s32.totalorder %s26, 2
      %s28 = scalar_select %p27, 0, %s26
      %s29 = sadd.s32 1, %s20
      %s30 = scalar_select %p27, %s29, %s20
      %p31 = scmp.ge.s32.totalorder %s30, 1
      %s32 = scalar_select %p31, 0, %s30
      %s33 = ssub.s32 %s20, %s32
      %p34 = scmp.eq.s32.totalorder %s33, 0
      %s36 = sadd.s32 %s35, 1
      %s37 = scalar_select %p34, %s35, %s36
      %p40 = pneg %p34
      %p41 = scmp.eq.s32.totalorder %s13, 1
      %p42 = por %p40, %p41
      %p43 = scmp.ne.s32.totalorder %s35, %s38
      %p44 = scmp.eq.s32.totalorder %s13, 0
      %p45 = por %p43, %p44
      %p46 = scmp.ne.s32.totalorder %s35, %s38
      %p47 = scmp.eq.s32.totalorder %s18, 1
      %p48 = por %p46, %p47
      %p49 = scmp.ne.s32.totalorder %s38, %s39
      %p50 = scmp.eq.s32.totalorder %s18, 0
      %p51 = por %p49, %p50
      %p52 = scmp.ne.s32.totalorder %s38, %s39
      %p53 = scmp.eq.s32.totalorder %s19, 1
      %p54 = por %p52, %p53
      %p56 = scmp.ne.s32.totalorder %s39, %s55
      %p57 = scmp.eq.s32.totalorder %s19, 0
      %p58 = por %p56, %p57
      %s59 = ssub.s32 %s21, %s28
      %p60 = scmp.eq.s32.totalorder %s59, 0
      %s62 = sadd.s32 %s61, 1
      %s63 = scalar_select %p60, %s61, %s62
      %p66 = pneg %p60
      %p67 = scmp.eq.s32.totalorder %s13, 1
      %p68 = por %p66, %p67
      %p69 = scmp.ne.s32.totalorder %s61, %s64
      %p70 = scmp.eq.s32.totalorder %s13, 0
      %p71 = por %p69, %p70
      %p72 = scmp.ne.s32.totalorder %s61, %s64
      %p73 = scmp.eq.s32.totalorder %s18, 1
      %p74 = por %p72, %p73
      %p75 = scmp.ne.s32.totalorder %s64, %s65
      %p76 = scmp.eq.s32.totalorder %s18, 0
      %p77 = por %p75, %p76
      %p78 = scmp.ne.s32.totalorder %s64, %s65
      %p79 = scmp.eq.s32.totalorder %s19, 1
      %p80 = por %p78, %p79
      %p82 = scmp.ne.s32.totalorder %s65, %s81
      %p83 = scmp.eq.s32.totalorder %s19, 0
      %p84 = por %p82, %p83
      %s85 = ssub.s32 %s21, %s28
      %p86 = scmp.eq.s32.totalorder %s85, 0
      %s88 = sadd.s32 %s87, 1
      %s89 = scalar_select %p86, %s87, %s88
      %p92 = pneg %p86
      %p93 = scmp.eq.s32.totalorder %s13, 1
      %p94 = por %p92, %p93
      %p95 = scmp.ne.s32.totalorder %s87, %s90
      %p96 = scmp.eq.s32.totalorder %s13, 0
      %p97 = por %p95, %p96
      %p98 = scmp.ne.s32.totalorder %s87, %s90
      %p99 = scmp.eq.s32.totalorder %s18, 1
      %p100 = por %p98, %p99
      %p101 = scmp.ne.s32.totalorder %s90, %s91
      %p102 = scmp.eq.s32.totalorder %s18, 0
      %p103 = por %p101, %p102
      %p104 = scmp.ne.s32.totalorder %s90, %s91
      %p105 = scmp.eq.s32.totalorder %s19, 1
      %p106 = por %p104, %p105
      %p108 = scmp.ne.s32.totalorder %s91, %s107
      %p109 = scmp.eq.s32.totalorder %s19, 0
      %p110 = por %p108, %p109
      %s111 = ssub.s32 %s21, %s28
      %p112 = scmp.eq.s32.totalorder %s111, 0
      %s114 = sadd.s32 %s113, 1
      %s115 = scalar_select %p112, %s113, %s114
      %p118 = pneg %p112
      %p119 = scmp.eq.s32.totalorder %s13, 1
      %p120 = por %p118, %p119
      %p121 = scmp.ne.s32.totalorder %s113, %s116
      %p122 = scmp.eq.s32.totalorder %s13, 0
      %p123 = por %p121, %p122
      %p124 = scmp.ne.s32.totalorder %s113, %s116
      %p125 = scmp.eq.s32.totalorder %s18, 1
      %p126 = por %p124, %p125
      %p127 = scmp.ne.s32.totalorder %s116, %s117
      %p128 = scmp.eq.s32.totalorder %s18, 0
      %p129 = por %p127, %p128
      %p130 = scmp.ne.s32.totalorder %s116, %s117
      %p131 = scmp.eq.s32.totalorder %s19, 1
      %p132 = por %p130, %p131
      %p134 = scmp.ne.s32.totalorder %s117, %s133
      %p135 = scmp.eq.s32.totalorder %s19, 0
      %p136 = por %p134, %p135
      %s137 = ssub.s32 %s21, %s28
      %p138 = scmp.eq.s32.totalorder %s137, 0
      %s140 = sadd.s32 %s139, 1
      %s141 = scalar_select %p138, %s139, %s140
      %p144 = pneg %p138
      %p145 = scmp.eq.s32.totalorder %s13, 1
      %p146 = por %p144, %p145
      %p147 = scmp.ne.s32.totalorder %s139, %s142
      %p148 = scmp.eq.s32.totalorder %s13, 0
      %p149 = por %p147, %p148
      %p150 = scmp.ne.s32.totalorder %s139, %s142
      %p151 = scmp.eq.s32.totalorder %s18, 1
      %p152 = por %p150, %p151
      %p153 = scmp.ne.s32.totalorder %s142, %s143
      %p154 = scmp.eq.s32.totalorder %s18, 0
      %p155 = por %p153, %p154
      %p156 = scmp.ne.s32.totalorder %s142, %s143
      %p157 = scmp.eq.s32.totalorder %s19, 1
      %p158 = por %p156, %p157
      %p160 = scmp.ne.s32.totalorder %s143, %s159
      %p161 = scmp.eq.s32.totalorder %s19, 0
      %p162 = por %p160, %p161
      %s163 = ssub.s32 %s21, %s28
      %p164 = scmp.eq.s32.totalorder %s163, 0
      %s166 = sadd.s32 %s165, 1
      %s167 = scalar_select %p164, %s165, %s166
      %p170 = pneg %p164
      %p171 = scmp.eq.s32.totalorder %s13, 1
      %p172 = por %p170, %p171
      %p173 = scmp.ne.s32.totalorder %s165, %s168
      %p174 = scmp.eq.s32.totalorder %s13, 0
      %p175 = por %p173, %p174
      %p176 = scmp.ne.s32.totalorder %s165, %s168
      %p177 = scmp.eq.s32.totalorder %s18, 1
      %p178 = por %p176, %p177
      %p179 = scmp.ne.s32.totalorder %s168, %s169
      %p180 = scmp.eq.s32.totalorder %s18, 0
      %p181 = por %p179, %p180
      %p182 = scmp.ne.s32.totalorder %s168, %s169
      %p183 = scmp.eq.s32.totalorder %s19, 1
      %p184 = por %p182, %p183
      %p186 = scmp.ne.s32.totalorder %s169, %s185
      %p187 = scmp.eq.s32.totalorder %s19, 0
      %p188 = por %p186, %p187
      %s189 = ssub.s32 %s20, %s32
      %p190 = scmp.eq.s32.totalorder %s189, 0
      %s192 = sadd.s32 %s191, 1
      %s193 = scalar_select %p190, %s191, %s192
      %p196 = pneg %p190
      %p197 = scmp.eq.s32.totalorder %s13, 1
      %p198 = por %p196, %p197
      %p199 = scmp.ne.s32.totalorder %s191, %s194
      %p200 = scmp.eq.s32.totalorder %s13, 0
      %p201 = por %p199, %p200
      %p202 = scmp.ne.s32.totalorder %s191, %s194
      %p203 = scmp.eq.s32.totalorder %s18, 1
      %p204 = por %p202, %p203
      %p205 = scmp.ne.s32.totalorder %s194, %s195
      %p206 = scmp.eq.s32.totalorder %s18, 0
      %p207 = por %p205, %p206
      %p208 = scmp.ne.s32.totalorder %s194, %s195
      %p209 = scmp.eq.s32.totalorder %s19, 1
      %p210 = por %p208, %p209
      %p212 = scmp.ne.s32.totalorder %s195, %s211
      %p213 = scmp.eq.s32.totalorder %s19, 0
      %p214 = por %p212, %p213
      %p215 = scmp.le.s32.totalorder 1, %s13
      %p216 = scmp.lt.s32.totalorder %s13, 3
      %p217 = pnand %p215, %p216
      %p218 = pneg %p217
      // Predicated region
      $region9: #{tpu_custom_call.1} parent=5 // pred_check
        _
      $region10: #{tpu_custom_call.1} parent=5 // pred_check_branch
        %220 = sbr.rel (%p217) target = $region12
      $region11: #{tpu_custom_call.1} parent=5 // pred_region
        %s221 = ssub.s32 %s13, 1
        // Predicated region
        $region13: #{tpu_custom_call.1} parent=11 // pred_check
          %p222 = pneg %p51
        $region14: #{tpu_custom_call.1} parent=11 // pred_check_branch
          %224 = sbr.rel (%p222) target = $region16
        $region15: #{tpu_custom_call.1} parent=11 // pred_region
          %s225 = smul.u32 2, %s22
          %p226 = scmp.lt.s32.totalorder %s225, 1
          %s227 = scalar_select %p226, %s225, 1
          %s228 = smul.addr %s227, 8
          %s229 = scalar_lea.vmem %s0, %s228
          %s230 = smul.u32 2, %s22
        $region16: #{tpu_custom_call.1} parent=11 // pred_fallthru
          _
      $region12: #{tpu_custom_call.1} parent=5 // pred_fallthru
        _
      %p231 = scmp.lt.s32.totalorder %s13, 2
      // Predicated region
      $region17: #{tpu_custom_call.1} parent=5 // pred_check
        %p232 = pneg %p231
      $region18: #{tpu_custom_call.1} parent=5 // pred_check_branch
        %234 = sbr.rel (%p232) target = $region20
      $region19: #{tpu_custom_call.1} parent=5 // pred_region
        // Predicated region
        $region21: #{tpu_custom_call.1} parent=19 // pred_check
          %p235 = pneg %p71
        $region22: #{tpu_custom_call.1} parent=19 // pred_check_branch
          %237 = sbr.rel (%p235) target = $region24
        $region23: #{tpu_custom_call.1} parent=19 // pred_region
          %p238 = scmp.lt.s32.totalorder %s21, 1
          %s239 = scalar_select %p238, %s21, 1
          %s240 = smul.addr %s239, 4
          %s241 = smul.addr %s240, 4
          %s242 = scalar_lea.vmem %s1, %s241
        $region24: #{tpu_custom_call.1} parent=19 // pred_fallthru
          _
        // Predicated region
        $region25: #{tpu_custom_call.1} parent=19 // pred_check
          %p243 = pneg %p97
        $region26: #{tpu_custom_call.1} parent=19 // pred_check_branch
          %245 = sbr.rel (%p243) target = $region28
        $region27: #{tpu_custom_call.1} parent=19 // pred_region
          %p246 = scmp.lt.s32.totalorder %s21, 1
          %s247 = scalar_select %p246, %s21, 1
          %s248 = smul.addr %s247, 4
          %s249 = smul.addr %s248, 4
          %s250 = scalar_lea.vmem %s2, %s249
        $region28: #{tpu_custom_call.1} parent=19 // pred_fallthru
          _
        // Predicated region
        $region29: #{tpu_custom_call.1} parent=19 // pred_check
          %p251 = pneg %p123
        $region30: #{tpu_custom_call.1} parent=19 // pred_check_branch
          %253 = sbr.rel (%p251) target = $region32
        $region31: #{tpu_custom_call.1} parent=19 // pred_region
          %p254 = scmp.lt.s32.totalorder %s21, 1
          %s255 = scalar_select %p254, %s21, 1
          %s256 = smul.addr %s255, 4
          %s257 = smul.addr %s256, 4
          %s258 = scalar_lea.vmem %s3, %s257
        $region32: #{tpu_custom_call.1} parent=19 // pred_fallthru
          _
        // Predicated region
        $region33: #{tpu_custom_call.1} parent=19 // pred_check
          %p259 = pneg %p149
        $region34: #{tpu_custom_call.1} parent=19 // pred_check_branch
          %261 = sbr.rel (%p259) target = $region36
        $region35: #{tpu_custom_call.1} parent=19 // pred_region
          %p262 = scmp.lt.s32.totalorder %s21, 1
          %s263 = scalar_select %p262, %s21, 1
          %s264 = smul.addr %s263, 16
          %s265 = smul.addr %s264, 4
          %s266 = scalar_lea.vmem %s4, %s265
        $region36: #{tpu_custom_call.1} parent=19 // pred_fallthru
          _
        // Predicated region
        $region37: #{tpu_custom_call.1} parent=19 // pred_check
          %p267 = pneg %p175
        $region38: #{tpu_custom_call.1} parent=19 // pred_check_branch
          %269 = sbr.rel (%p267) target = $region40
        $region39: #{tpu_custom_call.1} parent=19 // pred_region
          %p270 = scmp.lt.s32.totalorder %s21, 1
          %s271 = scalar_select %p270, %s21, 1
          %s272 = smul.addr %s271, 8
          %s273 = scalar_lea.vmem %s5, %s272
        $region40: #{tpu_custom_call.1} parent=19 // pred_fallthru
          _
      $region20: #{tpu_custom_call.1} parent=5 // pred_fallthru
        _
      %p274 = scmp.le.s32.totalorder 1, %s13
      %p275 = scmp.lt.s32.totalorder %s13, 3
      %p276 = pnand %p274, %p275
      %p277 = pneg %p276
      // Predicated region
      $region41: #{tpu_custom_call.1} parent=5 // pred_check
        _
      $region42: #{tpu_custom_call.1} parent=5 // pred_check_branch
        %279 = sbr.rel (%p276) target = $region44
      $region43: #{tpu_custom_call.1} parent=5 // pred_region
        %s280 = ssub.s32 %s13, 1
        %s281 = smul.u32 2, %s22
        %p282 = scmp.lt.s32.totalorder %s281, 1
        %s283 = scalar_select %p282, %s281, 1
        %s284 = smul.addr %s283, 8
        %s285 = scalar_lea.vmem %s0, %s284
        %p286 = pneg %p51
        %p287 = pneg %p48
        %p288 = scmp.lt.s32.totalorder %s23, 1
        %s289 = scalar_select %p288, %s23, 1
        %s290 = smul.addr %s289, 4
        %s291 = smul.addr %s290, 4
        %s292 = scalar_lea.vmem %s1, %s291
        %p293 = pneg %p77
        %p294 = pneg %p74
        %p295 = scmp.lt.s32.totalorder %s23, 1
        %s296 = scalar_select %p295, %s23, 1
        %s297 = smul.addr %s296, 4
        %s298 = smul.addr %s297, 4
        %s299 = scalar_lea.vmem %s2, %s298
        %p300 = pneg %p103
        %p301 = pneg %p100
        %p302 = scmp.lt.s32.totalorder %s23, 1
        %s303 = scalar_select %p302, %s23, 1
        %s304 = smul.addr %s303, 4
        %s305 = smul.addr %s304, 4
        %s306 = scalar_lea.vmem %s3, %s305
        %p307 = pneg %p129
        %p308 = pneg %p126
        %p309 = scmp.lt.s32.totalorder %s23, 1
        %s310 = scalar_select %p309, %s23, 1
        %s311 = smul.addr %s310, 16
        %s312 = smul.addr %s311, 4
        %s313 = scalar_lea.vmem %s4, %s312
        %p314 = pneg %p155
        %p315 = pneg %p152
        %p316 = scmp.lt.s32.totalorder %s23, 1
        %s317 = scalar_select %p316, %s23, 1
        %s318 = smul.addr %s317, 8
        %s319 = scalar_lea.vmem %s5, %s318
        %p320 = pneg %p181
        %p321 = pneg %p178
        %p322 = pneg %p207
        %p323 = pneg %p204
        %s324 = smul.u32 2, %s22
        %p325 = scmp.lt.s32.totalorder %s324, 1
        %s326 = scalar_select %p325, %s324, 1
        %s327 = smul.addr %s326, 8
        %s328 = scalar_lea.vmem %s0, %s327
        %s329 = smul.u32 2, %s22
        %p330 = scmp.lt.s32.totalorder %s23, 1
        %s331 = scalar_select %p330, %s23, 1
        %s332 = smul.addr %s331, 4
        %s333 = smul.addr %s332, 4
        %s334 = scalar_lea.vmem %s1, %s333
        %p335 = scmp.lt.s32.totalorder %s23, 1
        %s336 = scalar_select %p335, %s23, 1
        %s337 = smul.addr %s336, 4
        %s338 = smul.addr %s337, 4
        %s339 = scalar_lea.vmem %s2, %s338
        %p340 = scmp.lt.s32.totalorder %s23, 1
        %s341 = scalar_select %p340, %s23, 1
        %s342 = smul.addr %s341, 4
        %s343 = smul.addr %s342, 4
        %s344 = scalar_lea.vmem %s3, %s343
        %p345 = scmp.lt.s32.totalorder %s23, 1
        %s346 = scalar_select %p345, %s23, 1
        %s347 = smul.addr %s346, 16
        %s348 = smul.addr %s347, 4
        %s349 = scalar_lea.vmem %s4, %s348
        %p350 = scmp.lt.s32.totalorder %s23, 1
        %s351 = scalar_select %p350, %s23, 1
        %s352 = smul.addr %s351, 8
        %s353 = scalar_lea.vmem %s5, %s352
        %s354 = smul.u32 2, %s22
        %p356 = scmp.eq.s32.totalorder %s23, 0
        // Predicated region
        $region45: #{tpu_custom_call.1} parent=43 // pred_check
          %p357 = pneg %p356
        $region46: #{tpu_custom_call.1} parent=43 // pred_check_branch
          %359 = sbr.rel (%p357) target = $region48
        $region47: #{tpu_custom_call.1} parent=43 // pred_region
          %v360 = vld [vmem:[%s328] sm:$0xff]
          %v361 = vld [vmem:[%s328 + $0x8] sm:$0xff]
          %vm362 = vcmask 261120
          %363 = vst.msk [vmem:[#allocation2] sm:$0xff] %vm362, %v360
          %364 = vst.msk [vmem:[#allocation2 + $0x8] sm:$0xff] %vm362, %v361
        $region48: #{tpu_custom_call.1} parent=43 // pred_fallthru
          _
        %v365 = vld [vmem:[#allocation2] sm:$0xff]
        %v366 = vld [vmem:[#allocation2 + $0x8] sm:$0xff]
        %v367 = vld [vmem:[%s353] sm:$0xff]
        %v368 = vpack.c.bf16 %v366, %v365
        %v369 = vld [vmem:[%s334] sm:$0xf]
        %v370 = vld [vmem:[%s334 + $0x4] sm:$0xf]
        %v371 = vld [vmem:[%s334 + $0x8] sm:$0xf]
        %v372 = vld [vmem:[%s334 + $0xc] sm:$0xf]
        %v373 = vlaneseq
        %v374 = vshrl.u32 %v373, 7
        %v375 = vsub.s32 0, %v374
        %v376 = vrot.slane %v367, %v375
        %v381 = vunpack.c.l.b16 %v369
        %v382 = vunpack.c.l.b16 %v370
        %v383 = vunpack.c.l.b16 %v371
        %v384 = vunpack.c.l.b16 %v372
        %v385 = vpack.c.b16 %v382, %v381
        %v386 = vpack.c.b16 %v384, %v383
        %vm389 = vcmask 261120
        %v391 = vsel %vm389, %v368, 0
        %393 = vmatprep.subr.bf16.mxu0 0
        %394 = vmatpush1.bf16.msra.mxu0 %v385
        %395 = vmatprep.subr.bf16.mxu0 0
        %396 = vmatpush1.bf16.msra.mxu0 %v386
        %397 = vmatprep.subr.bf16.mxu0 0
        %398 = vmatpush1.bf16.msra.mxu0 0
        %399 = vmatprep.subr.bf16.mxu0 0
        %400 = vmatpush1.bf16.msra.mxu0 0
        %401 = vmatprep.subr.bf16.mxu0 0
        %402 = vmatpush1.bf16.msra.mxu0 0
        %403 = vmatprep.subr.bf16.mxu0 0
        %404 = vmatpush1.bf16.msra.mxu0 0
        %405 = vmatprep.subr.bf16.mxu0 0
        %406 = vmatpush1.bf16.msra.mxu0 0
        %407 = vmatprep.subr.bf16.mxu0 0
        %408 = vmatpush1.bf16.msra.mxu0 0
        %409 = vmatprep.subr.bf16.mxu0 0
        %410 = vmatpush1.bf16.msra.mxu0 0
        %411 = vmatprep.subr.bf16.mxu0 0
        %412 = vmatpush1.bf16.msra.mxu0 0
        %413 = vmatprep.subr.bf16.mxu0 0
        %414 = vmatpush1.bf16.msra.mxu0 0
        %415 = vmatprep.subr.bf16.mxu0 0
        %416 = vmatpush1.bf16.msra.mxu0 0
        %417 = vmatprep.subr.bf16.mxu0 0
        %418 = vmatpush1.bf16.msra.mxu0 0
        %419 = vmatprep.subr.bf16.mxu0 0
        %420 = vmatpush1.bf16.msra.mxu0 0
        %421 = vmatprep.subr.bf16.mxu0 0
        %422 = vmatpush1.bf16.msra.mxu0 0
        %423 = vmatprep.subr.bf16.mxu0 0
        %424 = vmatpush1.bf16.msra.mxu0 0
        %425 = vmatprep.mubr.bf16.mxu0 0
        %426 = vmatmul.mubr.bf16.gmra.mrb[0].mxu0 %v391
        %v427 = vpop.f32.mrb[0].mxu0
        %v428 = vadd.f32 %v376, %v427
        %v429 = vpop.f32.mrb[0].mxu0
        %v430 = vpop.f32.mrb[0].mxu0
        %v431 = vadd.f32 %v376, %v430
        %v432 = vpop.f32.mrb[0].mxu0
        %433 = vdwg.mxu0
        %v434 = vpack.c.bf16 %v431, %v428
        %v436 = vunpack.c.l.b16 %v434
        %v437 = vunpack.c.h.b16 %v434
        %v438 = vlaneseq
        %v439 = vand.u32 %v438, 127
        %vm440 = vcmp.ge.s32.totalorder %v439, 0
        %vm441 = vcmp.lt.s32.totalorder %v439, 8
        %vm442 = vmand %vm440, %vm441
        %v443 = vsel %vm442, 1, 0
        %v444 = vcvt.s32.f32 %v443
        %v445 = vmul.f32 %v428, %v444
        %v446 = vmul.f32 %v431, %v444
        %v447 = vpack.c.bf16 %v445, %v445
        %v448 = vpack.c.bf16 %v446, %v446
        %v449 = vpack.c.b16 %v436, %v436
        %450 = vrot.lane.b32.xlu0 %v449, 96
        %v451 = vpop.permute.xlu0 %450
        %v453 = vsel %vm389, %v447, 0
        %v456 = vsel %vm389, %v451, 0
        %458 = vmatprep.subr.bf16.mxu0 0
        %459 = vmatpush1.bf16.xpose.msra.mxu0 %v456
        %460 = vmatprep.subr.bf16.mxu0 0
        %461 = vmatpush1.bf16.xpose.msra.mxu0 0
        %462 = vmatprep.subr.bf16.mxu0 0
        %463 = vmatpush1.bf16.xpose.msra.mxu0 0
        %464 = vmatprep.subr.bf16.mxu0 0
        %465 = vmatpush1.bf16.xpose.msra.mxu0 0
        %466 = vmatprep.subr.bf16.mxu0 0
        %467 = vmatpush1.bf16.xpose.msra.mxu0 0
        %468 = vmatprep.subr.bf16.mxu0 0
        %469 = vmatpush1.bf16.xpose.msra.mxu0 0
        %470 = vmatprep.subr.bf16.mxu0 0
        %471 = vmatpush1.bf16.xpose.msra.mxu0 0
        %472 = vmatprep.subr.bf16.mxu0 0
        %473 = vmatpush1.bf16.xpose.msra.mxu0 0
        %474 = vmatprep.subr.bf16.mxu0 0
        %475 = vmatpush1.bf16.xpose.msra.mxu0 0
        %476 = vmatprep.subr.bf16.mxu0 0
        %477 = vmatpush1.bf16.xpose.msra.mxu0 0
        %478 = vmatprep.subr.bf16.mxu0 0
        %479 = vmatpush1.bf16.xpose.msra.mxu0 0
        %480 = vmatprep.subr.bf16.mxu0 0
        %481 = vmatpush1.bf16.xpose.msra.mxu0 0
        %482 = vmatprep.subr.bf16.mxu0 0
        %483 = vmatpush1.bf16.xpose.msra.mxu0 0
        %484 = vmatprep.subr.bf16.mxu0 0
        %485 = vmatpush1.bf16.xpose.msra.mxu0 0
        %486 = vmatprep.subr.bf16.mxu0 0
        %487 = vmatpush1.bf16.xpose.msra.mxu0 0
        %488 = vmatprep.subr.bf16.mxu0 0
        %489 = vmatpush1.bf16.xpose.msra.mxu0 0
        %490 = vmatprep.mubr.bf16.mxu0 0
        %491 = vmatmul.mubr.bf16.gmra.mrb[0].mxu0 %v453
        %v492 = vpop.f32.mrb[0].mxu0
        %v493 = vadd.f32 0.0, %v492
        %v494 = vpop.f32.mrb[0].mxu0
        %v495 = vpop.f32.mrb[0].mxu0
        %v496 = vpop.f32.mrb[0].mxu0
        %497 = vdwg.mxu0
        %v498 = vpack.c.b16 %v437, %v437
        %499 = vrot.lane.b32.xlu0 %v498, 96
        %v500 = vpop.permute.xlu0 %499
        %v502 = vsel %vm389, %v448, 0
        %v505 = vsel %vm389, %v500, 0
        %507 = vmatprep.subr.bf16.mxu0 0
        %508 = vmatpush1.bf16.xpose.msra.mxu0 %v505
        %509 = vmatprep.subr.bf16.mxu0 0
        %510 = vmatpush1.bf16.xpose.msra.mxu0 0
        %511 = vmatprep.subr.bf16.mxu0 0
        %512 = vmatpush1.bf16.xpose.msra.mxu0 0
        %513 = vmatprep.subr.bf16.mxu0 0
        %514 = vmatpush1.bf16.xpose.msra.mxu0 0
        %515 = vmatprep.subr.bf16.mxu0 0
        %516 = vmatpush1.bf16.xpose.msra.mxu0 0
        %517 = vmatprep.subr.bf16.mxu0 0
        %518 = vmatpush1.bf16.xpose.msra.mxu0 0
        %519 = vmatprep.subr.bf16.mxu0 0
        %520 = vmatpush1.bf16.xpose.msra.mxu0 0
        %521 = vmatprep.subr.bf16.mxu0 0
        %522 = vmatpush1.bf16.xpose.msra.mxu0 0
        %523 = vmatprep.subr.bf16.mxu0 0
        %524 = vmatpush1.bf16.xpose.msra.mxu0 0
        %525 = vmatprep.subr.bf16.mxu0 0
        %526 = vmatpush1.bf16.xpose.msra.mxu0 0
        %527 = vmatprep.subr.bf16.mxu0 0
        %528 = vmatpush1.bf16.xpose.msra.mxu0 0
        %529 = vmatprep.subr.bf16.mxu0 0
        %530 = vmatpush1.bf16.xpose.msra.mxu0 0
        %531 = vmatprep.subr.bf16.mxu0 0
        %532 = vmatpush1.bf16.xpose.msra.mxu0 0
        %533 = vmatprep.subr.bf16.mxu0 0
        %534 = vmatpush1.bf16.xpose.msra.mxu0 0
        %535 = vmatprep.subr.bf16.mxu0 0
        %536 = vmatpush1.bf16.xpose.msra.mxu0 0
        %537 = vmatprep.subr.bf16.mxu0 0
        %538 = vmatpush1.bf16.xpose.msra.mxu0 0
        %539 = vmatprep.mubr.bf16.mxu0 0
        %540 = vmatmul.mubr.bf16.gmra.mrb[0].mxu0 %v502
        %v541 = vpop.f32.mrb[0].mxu0
        %v542 = vadd.f32 0.0, %v541
        %v543 = vpop.f32.mrb[0].mxu0
        %v544 = vpop.f32.mrb[0].mxu0
        %v545 = vpop.f32.mrb[0].mxu0
        %546 = vdwg.mxu0
        %v547 = vmul.f32 %v493, 0.35355338
        %v548 = vmul.f32 %v542, 0.35355338
        %vm549 = vcmask 64512
        %v550 = vsel %vm549, %v547, -inf
        %551 = vmax.xlane.f32.xlu0 %v550
        %v552 = vpop.xlane.xlu0 %551
        %v553 = vsel %vm549, %v548, -inf
        %554 = vmax.xlane.f32.xlu0 %v553
        %v555 = vpop.xlane.xlu0 %554
        %v556 = vsub.f32 %v547, %v552
        %v557 = vsub.f32 %v548, %v555
        %v558 = vmul.f32 %v556, 1.442695
        %v559 = vpow.pop %v558
        %v560 = vmul.f32 %v557, 1.442695
        %v561 = vpow.pop %v560
        %v562 = vsel %vm549, %v559, 0.0
        %563 = vadd.xlane.f32.xlu0 %v562
        %v564 = vpop.xlane.xlu0 %563
        %v565 = vsel %vm549, %v561, 0.0
        %566 = vadd.xlane.f32.xlu0 %v565
        %v567 = vpop.xlane.xlu0 %566
        %v568 = vrcp.pop %v564
        %v569 = vrcp.pop %v567
        %v570 = vmul.f32 %v559, %v568
        %v571 = vmul.f32 %v561, %v569
        %v572 = vpack.c.bf16 %v570, %v570
        %v573 = vpack.c.bf16 %v571, %v571
        %574 = vrot.lane.b32.xlu0 %v449, 64
        %v575 = vpop.permute.xlu0 %574
        %v577 = vsel %vm549, %v572, 0
        %vm579 = vcmask 1043456
        %v581 = vsel %vm579, %v575, 0
        %583 = vmatprep.subr.bf16.mxu0 0
        %584 = vmatpush1.bf16.msra.mxu0 %v581
        %585 = vmatprep.subr.bf16.mxu0 0
        %586 = vmatpush1.bf16.msra.mxu0 0
        %587 = vmatprep.subr.bf16.mxu0 0
        %588 = vmatpush1.bf16.msra.mxu0 0
        %589 = vmatprep.subr.bf16.mxu0 0
        %590 = vmatpush1.bf16.msra.mxu0 0
        %591 = vmatprep.subr.bf16.mxu0 0
        %592 = vmatpush1.bf16.msra.mxu0 0
        %593 = vmatprep.subr.bf16.mxu0 0
        %594 = vmatpush1.bf16.msra.mxu0 0
        %595 = vmatprep.subr.bf16.mxu0 0
        %596 = vmatpush1.bf16.msra.mxu0 0
        %597 = vmatprep.subr.bf16.mxu0 0
        %598 = vmatpush1.bf16.msra.mxu0 0
        %599 = vmatprep.subr.bf16.mxu0 0
        %600 = vmatpush1.bf16.msra.mxu0 0
        %601 = vmatprep.subr.bf16.mxu0 0
        %602 = vmatpush1.bf16.msra.mxu0 0
        %603 = vmatprep.subr.bf16.mxu0 0
        %604 = vmatpush1.bf16.msra.mxu0 0
        %605 = vmatprep.subr.bf16.mxu0 0
        %606 = vmatpush1.bf16.msra.mxu0 0
        %607 = vmatprep.subr.bf16.mxu0 0
        %608 = vmatpush1.bf16.msra.mxu0 0
        %609 = vmatprep.subr.bf16.mxu0 0
        %610 = vmatpush1.bf16.msra.mxu0 0
        %611 = vmatprep.subr.bf16.mxu0 0
        %612 = vmatpush1.bf16.msra.mxu0 0
        %613 = vmatprep.subr.bf16.mxu0 0
        %614 = vmatpush1.bf16.msra.mxu0 0
        %615 = vmatprep.mubr.bf16.mxu0 0
        %616 = vmatmul.mubr.bf16.gmra.mrb[0].mxu0 %v577
        %v617 = vpop.f32.mrb[0].mxu0
        %v618 = vadd.f32 0.0, %v617
        %v619 = vpop.f32.mrb[0].mxu0
        %v620 = vpop.f32.mrb[0].mxu0
        %v621 = vpop.f32.mrb[0].mxu0
        %622 = vdwg.mxu0
        %623 = vrot.lane.b32.xlu0 %v498, 64
        %v624 = vpop.permute.xlu0 %623
        %v626 = vsel %vm549, %v573, 0
        %v629 = vsel %vm579, %v624, 0
        %631 = vmatprep.subr.bf16.mxu0 0
        %632 = vmatpush1.bf16.msra.mxu0 %v629
        %633 = vmatprep.subr.bf16.mxu0 0
        %634 = vmatpush1.bf16.msra.mxu0 0
        %635 = vmatprep.subr.bf16.mxu0 0
        %636 = vmatpush1.bf16.msra.mxu0 0
        %637 = vmatprep.subr.bf16.mxu0 0
        %638 = vmatpush1.bf16.msra.mxu0 0
        %639 = vmatprep.subr.bf16.mxu0 0
        %640 = vmatpush1.bf16.msra.mxu0 0
        %641 = vmatprep.subr.bf16.mxu0 0
        %642 = vmatpush1.bf16.msra.mxu0 0
        %643 = vmatprep.subr.bf16.mxu0 0
        %644 = vmatpush1.bf16.msra.mxu0 0
        %645 = vmatprep.subr.bf16.mxu0 0
        %646 = vmatpush1.bf16.msra.mxu0 0
        %647 = vmatprep.subr.bf16.mxu0 0
        %648 = vmatpush1.bf16.msra.mxu0 0
        %649 = vmatprep.subr.bf16.mxu0 0
        %650 = vmatpush1.bf16.msra.mxu0 0
        %651 = vmatprep.subr.bf16.mxu0 0
        %652 = vmatpush1.bf16.msra.mxu0 0
        %653 = vmatprep.subr.bf16.mxu0 0
        %654 = vmatpush1.bf16.msra.mxu0 0
        %655 = vmatprep.subr.bf16.mxu0 0
        %656 = vmatpush1.bf16.msra.mxu0 0
        %657 = vmatprep.subr.bf16.mxu0 0
        %658 = vmatpush1.bf16.msra.mxu0 0
        %659 = vmatprep.subr.bf16.mxu0 0
        %660 = vmatpush1.bf16.msra.mxu0 0
        %661 = vmatprep.subr.bf16.mxu0 0
        %662 = vmatpush1.bf16.msra.mxu0 0
        %663 = vmatprep.mubr.bf16.mxu0 0
        %664 = vmatmul.mubr.bf16.gmra.mrb[0].mxu0 %v626
        %v665 = vpop.f32.mrb[0].mxu0
        %v666 = vadd.f32 0.0, %v665
        %v667 = vpop.f32.mrb[0].mxu0
        %v668 = vpop.f32.mrb[0].mxu0
        %v669 = vpop.f32.mrb[0].mxu0
        %670 = vdwg.mxu0
        %v671 = vmul.f32 %v618, %v444
        %v672 = vmul.f32 %v666, %v444
        %v673 = vadd.f32 %v671, 0.0
        %v674 = vadd.f32 %v672, 0.0
        %vm675 = vcmp.ge.s32.totalorder %v439, 8
        %vm676 = vcmp.lt.s32.totalorder %v439, 16
        %vm677 = vmand %vm675, %vm676
        %v678 = vsel %vm677, 1, 0
        %v679 = vcvt.s32.f32 %v678
        %v680 = vmul.f32 %v428, %v679
        %v681 = vmul.f32 %v431, %v679
        %v682 = vpack.c.bf16 %v680, %v680
        %v683 = vpack.c.bf16 %v681, %v681
        %v685 = vsel %vm389, %v682, 0
        %687 = vmatprep.subr.bf16.mxu0 0
        %688 = vmatpush1.bf16.xpose.msra.mxu0 %v456
        %689 = vmatprep.subr.bf16.mxu0 0
        %690 = vmatpush1.bf16.xpose.msra.mxu0 0
        %691 = vmatprep.subr.bf16.mxu0 0
        %692 = vmatpush1.bf16.xpose.msra.mxu0 0
        %693 = vmatprep.subr.bf16.mxu0 0
        %694 = vmatpush1.bf16.xpose.msra.mxu0 0
        %695 = vmatprep.subr.bf16.mxu0 0
        %696 = vmatpush1.bf16.xpose.msra.mxu0 0
        %697 = vmatprep.subr.bf16.mxu0 0
        %698 = vmatpush1.bf16.xpose.msra.mxu0 0
        %699 = vmatprep.subr.bf16.mxu0 0
        %700 = vmatpush1.bf16.xpose.msra.mxu0 0
        %701 = vmatprep.subr.bf16.mxu0 0
        %702 = vmatpush1.bf16.xpose.msra.mxu0 0
        %703 = vmatprep.subr.bf16.mxu0 0
        %704 = vmatpush1.bf16.xpose.msra.mxu0 0
        %705 = vmatprep.subr.bf16.mxu0 0
        %706 = vmatpush1.bf16.xpose.msra.mxu0 0
        %707 = vmatprep.subr.bf16.mxu0 0
        %708 = vmatpush1.bf16.xpose.msra.mxu0 0
        %709 = vmatprep.subr.bf16.mxu0 0
        %710 = vmatpush1.bf16.xpose.msra.mxu0 0
        %711 = vmatprep.subr.bf16.mxu0 0
        %712 = vmatpush1.bf16.xpose.msra.mxu0 0
        %713 = vmatprep.subr.bf16.mxu0 0
        %714 = vmatpush1.bf16.xpose.msra.mxu0 0
        %715 = vmatprep.subr.bf16.mxu0 0
        %716 = vmatpush1.bf16.xpose.msra.mxu0 0
        %717 = vmatprep.subr.bf16.mxu0 0
        %718 = vmatpush1.bf16.xpose.msra.mxu0 0
        %719 = vmatprep.mubr.bf16.mxu0 0
        %720 = vmatmul.mubr.bf16.gmra.mrb[0].mxu0 %v685
        %v721 = vpop.f32.mrb[0].mxu0
        %v722 = vadd.f32 0.0, %v721
        %v723 = vpop.f32.mrb[0].mxu0
        %v724 = vpop.f32.mrb[0].mxu0
        %v725 = vpop.f32.mrb[0].mxu0
        %726 = vdwg.mxu0
        %v728 = vsel %vm389, %v683, 0
        %730 = vmatprep.subr.bf16.mxu0 0
        %731 = vmatpush1.bf16.xpose.msra.mxu0 %v505
        %732 = vmatprep.subr.bf16.mxu0 0
        %733 = vmatpush1.bf16.xpose.msra.mxu0 0
        %734 = vmatprep.subr.bf16.mxu0 0
        %735 = vmatpush1.bf16.xpose.msra.mxu0 0
        %736 = vmatprep.subr.bf16.mxu0 0
        %737 = vmatpush1.bf16.xpose.msra.mxu0 0
        %738 = vmatprep.subr.bf16.mxu0 0
        %739 = vmatpush1.bf16.xpose.msra.mxu0 0
        %740 = vmatprep.subr.bf16.mxu0 0
        %741 = vmatpush1.bf16.xpose.msra.mxu0 0
        %742 = vmatprep.subr.bf16.mxu0 0
        %743 = vmatpush1.bf16.xpose.msra.mxu0 0
        %744 = vmatprep.subr.bf16.mxu0 0
        %745 = vmatpush1.bf16.xpose.msra.mxu0 0
        %746 = vmatprep.subr.bf16.mxu0 0
        %747 = vmatpush1.bf16.xpose.msra.mxu0 0
        %748 = vmatprep.subr.bf16.mxu0 0
        %749 = vmatpush1.bf16.xpose.msra.mxu0 0
        %750 = vmatprep.subr.bf16.mxu0 0
        %751 = vmatpush1.bf16.xpose.msra.mxu0 0
        %752 = vmatprep.subr.bf16.mxu0 0
        %753 = vmatpush1.bf16.xpose.msra.mxu0 0
        %754 = vmatprep.subr.bf16.mxu0 0
        %755 = vmatpush1.bf16.xpose.msra.mxu0 0
        %756 = vmatprep.subr.bf16.mxu0 0
        %757 = vmatpush1.bf16.xpose.msra.mxu0 0
        %758 = vmatprep.subr.bf16.mxu0 0
        %759 = vmatpush1.bf16.xpose.msra.mxu0 0
        %760 = vmatprep.subr.bf16.mxu0 0
        %761 = vmatpush1.bf16.xpose.msra.mxu0 0
        %762 = vmatprep.mubr.bf16.mxu0 0
        %763 = vmatmul.mubr.bf16.gmra.mrb[0].mxu0 %v728
        %v764 = vpop.f32.mrb[0].mxu0
        %v765 = vadd.f32 0.0, %v764
        %v766 = vpop.f32.mrb[0].mxu0
        %v767 = vpop.f32.mrb[0].mxu0
        %v768 = vpop.f32.mrb[0].mxu0
        %769 = vdwg.mxu0
        %v770 = vmul.f32 %v722, 0.35355338
        %v771 = vmul.f32 %v765, 0.35355338
        %v772 = vsel %vm549, %v770, -inf
        %773 = vmax.xlane.f32.xlu0 %v772
        %v774 = vpop.xlane.xlu0 %773
        %v775 = vsel %vm549, %v771, -inf
        %776 = vmax.xlane.f32.xlu0 %v775
        %v777 = vpop.xlane.xlu0 %776
        %v778 = vsub.f32 %v770, %v774
        %v779 = vsub.f32 %v771, %v777
        %v780 = vmul.f32 %v778, 1.442695
        %v781 = vpow.pop %v780
        %v782 = vmul.f32 %v779, 1.442695
        %v783 = vpow.pop %v782
        %v784 = vsel %vm549, %v781, 0.0
        %785 = vadd.xlane.f32.xlu0 %v784
        %v786 = vpop.xlane.xlu0 %785
        %v787 = vsel %vm549, %v783, 0.0
        %788 = vadd.xlane.f32.xlu0 %v787
        %v789 = vpop.xlane.xlu0 %788
        %v790 = vrcp.pop %v786
        %v791 = vrcp.pop %v789
        %v792 = vmul.f32 %v781, %v790
        %v793 = vmul.f32 %v783, %v791
        %v794 = vpack.c.bf16 %v792, %v792
        %v795 = vpack.c.bf16 %v793, %v793
        %v797 = vsel %vm549, %v794, 0
        %799 = vmatprep.subr.bf16.mxu0 0
        %800 = vmatpush1.bf16.msra.mxu0 %v581
        %801 = vmatprep.subr.bf16.mxu0 0
        %802 = vmatpush1.bf16.msra.mxu0 0
        %803 = vmatprep.subr.bf16.mxu0 0
        %804 = vmatpush1.bf16.msra.mxu0 0
        %805 = vmatprep.subr.bf16.mxu0 0
        %806 = vmatpush1.bf16.msra.mxu0 0
        %807 = vmatprep.subr.bf16.mxu0 0
        %808 = vmatpush1.bf16.msra.mxu0 0
        %809 = vmatprep.subr.bf16.mxu0 0
        %810 = vmatpush1.bf16.msra.mxu0 0
        %811 = vmatprep.subr.bf16.mxu0 0
        %812 = vmatpush1.bf16.msra.mxu0 0
        %813 = vmatprep.subr.bf16.mxu0 0
        %814 = vmatpush1.bf16.msra.mxu0 0
        %815 = vmatprep.subr.bf16.mxu0 0
        %816 = vmatpush1.bf16.msra.mxu0 0
        %817 = vmatprep.subr.bf16.mxu0 0
        %818 = vmatpush1.bf16.msra.mxu0 0
        %819 = vmatprep.subr.bf16.mxu0 0
        %820 = vmatpush1.bf16.msra.mxu0 0
        %821 = vmatprep.subr.bf16.mxu0 0
        %822 = vmatpush1.bf16.msra.mxu0 0
        %823 = vmatprep.subr.bf16.mxu0 0
        %824 = vmatpush1.bf16.msra.mxu0 0
        %825 = vmatprep.subr.bf16.mxu0 0
        %826 = vmatpush1.bf16.msra.mxu0 0
        %827 = vmatprep.subr.bf16.mxu0 0
        %828 = vmatpush1.bf16.msra.mxu0 0
        %829 = vmatprep.subr.bf16.mxu0 0
        %830 = vmatpush1.bf16.msra.mxu0 0
        %831 = vmatprep.mubr.bf16.mxu0 0
        %832 = vmatmul.mubr.bf16.gmra.mrb[0].mxu0 %v797
        %v833 = vpop.f32.mrb[0].mxu0
        %v834 = vadd.f32 0.0, %v833
        %v835 = vpop.f32.mrb[0].mxu0
        %v836 = vpop.f32.mrb[0].mxu0
        %v837 = vpop.f32.mrb[0].mxu0
        %838 = vdwg.mxu0
        %v840 = vsel %vm549, %v795, 0
        %842 = vmatprep.subr.bf16.mxu0 0
        %843 = vmatpush1.bf16.msra.mxu0 %v629
        %844 = vmatprep.subr.bf16.mxu0 0
        %845 = vmatpush1.bf16.msra.mxu0 0
        %846 = vmatprep.subr.bf16.mxu0 0
        %847 = vmatpush1.bf16.msra.mxu0 0
        %848 = vmatprep.subr.bf16.mxu0 0
        %849 = vmatpush1.bf16.msra.mxu0 0
        %850 = vmatprep.subr.bf16.mxu0 0
        %851 = vmatpush1.bf16.msra.mxu0 0
        %852 = vmatprep.subr.bf16.mxu0 0
        %853 = vmatpush1.bf16.msra.mxu0 0
        %854 = vmatprep.subr.bf16.mxu0 0
        %855 = vmatpush1.bf16.msra.mxu0 0
        %856 = vmatprep.subr.bf16.mxu0 0
        %857 = vmatpush1.bf16.msra.mxu0 0
        %858 = vmatprep.subr.bf16.mxu0 0
        %859 = vmatpush1.bf16.msra.mxu0 0
        %860 = vmatprep.subr.bf16.mxu0 0
        %861 = vmatpush1.bf16.msra.mxu0 0
        %862 = vmatprep.subr.bf16.mxu0 0
        %863 = vmatpush1.bf16.msra.mxu0 0
        %864 = vmatprep.subr.bf16.mxu0 0
        %865 = vmatpush1.bf16.msra.mxu0 0
        %866 = vmatprep.subr.bf16.mxu0 0
        %867 = vmatpush1.bf16.msra.mxu0 0
        %868 = vmatprep.subr.bf16.mxu0 0
        %869 = vmatpush1.bf16.msra.mxu0 0
        %870 = vmatprep.subr.bf16.mxu0 0
        %871 = vmatpush1.bf16.msra.mxu0 0
        %872 = vmatprep.subr.bf16.mxu0 0
        %873 = vmatpush1.bf16.msra.mxu0 0
        %874 = vmatprep.mubr.bf16.mxu0 0
        %875 = vmatmul.mubr.bf16.gmra.mrb[0].mxu0 %v840
        %v876 = vpop.f32.mrb[0].mxu0
        %v877 = vadd.f32 0.0, %v876
        %v878 = vpop.f32.mrb[0].mxu0
        %v879 = vpop.f32.mrb[0].mxu0
        %v880 = vpop.f32.mrb[0].mxu0
        %881 = vdwg.mxu0
        %v882 = vmul.f32 %v834, %v679
        %v883 = vmul.f32 %v877, %v679
        %v884 = vadd.f32 %v673, %v882
        %v885 = vadd.f32 %v674, %v883
        %vm886 = vcmp.ge.s32.totalorder %v439, 16
        %vm887 = vcmp.lt.s32.totalorder %v439, 24
        %vm888 = vmand %vm886, %vm887
        %v889 = vsel %vm888, 1, 0
        %v890 = vcvt.s32.f32 %v889
        %v891 = vmul.f32 %v428, %v890
        %v892 = vmul.f32 %v431, %v890
        %v893 = vpack.c.bf16 %v891, %v891
        %v894 = vpack.c.bf16 %v892, %v892
        %v896 = vsel %vm389, %v893, 0
        %898 = vmatprep.subr.bf16.mxu0 0
        %899 = vmatpush1.bf16.xpose.msra.mxu0 %v456
        %900 = vmatprep.subr.bf16.mxu0 0
        %901 = vmatpush1.bf16.xpose.msra.mxu0 0
        %902 = vmatprep.subr.bf16.mxu0 0
        %903 = vmatpush1.bf16.xpose.msra.mxu0 0
        %904 = vmatprep.subr.bf16.mxu0 0
        %905 = vmatpush1.bf16.xpose.msra.mxu0 0
        %906 = vmatprep.subr.bf16.mxu0 0
        %907 = vmatpush1.bf16.xpose.msra.mxu0 0
        %908 = vmatprep.subr.bf16.mxu0 0
        %909 = vmatpush1.bf16.xpose.msra.mxu0 0
        %910 = vmatprep.subr.bf16.mxu0 0
        %911 = vmatpush1.bf16.xpose.msra.mxu0 0
        %912 = vmatprep.subr.bf16.mxu0 0
        %913 = vmatpush1.bf16.xpose.msra.mxu0 0
        %914 = vmatprep.subr.bf16.mxu0 0
        %915 = vmatpush1.bf16.xpose.msra.mxu0 0
        %916 = vmatprep.subr.bf16.mxu0 0
        %917 = vmatpush1.bf16.xpose.msra.mxu0 0
        %918 = vmatprep.subr.bf16.mxu0 0
        %919 = vmatpush1.bf16.xpose.msra.mxu0 0
        %920 = vmatprep.subr.bf16.mxu0 0
        %921 = vmatpush1.bf16.xpose.msra.mxu0 0
        %922 = vmatprep.subr.bf16.mxu0 0
        %923 = vmatpush1.bf16.xpose.msra.mxu0 0
        %924 = vmatprep.subr.bf16.mxu0 0
        %925 = vmatpush1.bf16.xpose.msra.mxu0 0
        %926 = vmatprep.subr.bf16.mxu0 0
        %927 = vmatpush1.bf16.xpose.msra.mxu0 0
        %928 = vmatprep.subr.bf16.mxu0 0
        %929 = vmatpush1.bf16.xpose.msra.mxu0 0
        %930 = vmatprep.mubr.bf16.mxu0 0
        %931 = vmatmul.mubr.bf16.gmra.mrb[0].mxu0 %v896
        %v932 = vpop.f32.mrb[0].mxu0
        %v933 = vadd.f32 0.0, %v932
        %v934 = vpop.f32.mrb[0].mxu0
        %v935 = vpop.f32.mrb[0].mxu0
        %v936 = vpop.f32.mrb[0].mxu0
        %937 = vdwg.mxu0
        %v939 = vsel %vm389, %v894, 0
        %941 = vmatprep.subr.bf16.mxu0 0
        %942 = vmatpush1.bf16.xpose.msra.mxu0 %v505
        %943 = vmatprep.subr.bf16.mxu0 0
        %944 = vmatpush1.bf16.xpose.msra.mxu0 0
        %945 = vmatprep.subr.bf16.mxu0 0
        %946 = vmatpush1.bf16.xpose.msra.mxu0 0
        %947 = vmatprep.subr.bf16.mxu0 0
        %948 = vmatpush1.bf16.xpose.msra.mxu0 0
        %949 = vmatprep.subr.bf16.mxu0 0
        %950 = vmatpush1.bf16.xpose.msra.mxu0 0
        %951 = vmatprep.subr.bf16.mxu0 0
        %952 = vmatpush1.bf16.xpose.msra.mxu0 0
        %953 = vmatprep.subr.bf16.mxu0 0
        %954 = vmatpush1.bf16.xpose.msra.mxu0 0
        %955 = vmatprep.subr.bf16.mxu0 0
        %956 = vmatpush1.bf16.xpose.msra.mxu0 0
        %957 = vmatprep.subr.bf16.mxu0 0
        %958 = vmatpush1.bf16.xpose.msra.mxu0 0
        %959 = vmatprep.subr.bf16.mxu0 0
        %960 = vmatpush1.bf16.xpose.msra.mxu0 0
        %961 = vmatprep.subr.bf16.mxu0 0
        %962 = vmatpush1.bf16.xpose.msra.mxu0 0
        %963 = vmatprep.subr.bf16.mxu0 0
        %964 = vmatpush1.bf16.xpose.msra.mxu0 0
        %965 = vmatprep.subr.bf16.mxu0 0
        %966 = vmatpush1.bf16.xpose.msra.mxu0 0
        %967 = vmatprep.subr.bf16.mxu0 0
        %968 = vmatpush1.bf16.xpose.msra.mxu0 0
        %969 = vmatprep.subr.bf16.mxu0 0
        %970 = vmatpush1.bf16.xpose.msra.mxu0 0
        %971 = vmatprep.subr.bf16.mxu0 0
        %972 = vmatpush1.bf16.xpose.msra.mxu0 0
        %973 = vmatprep.mubr.bf16.mxu0 0
        %974 = vmatmul.mubr.bf16.gmra.mrb[0].mxu0 %v939
        %v975 = vpop.f32.mrb[0].mxu0
        %v976 = vadd.f32 0.0, %v975
        %v977 = vpop.f32.mrb[0].mxu0
        %v978 = vpop.f32.mrb[0].mxu0
        %v979 = vpop.f32.mrb[0].mxu0
        %980 = vdwg.mxu0
        %v981 = vmul.f32 %v933, 0.35355338
        %v982 = vmul.f32 %v976, 0.35355338
        %v983 = vsel %vm549, %v981, -inf
        %984 = vmax.xlane.f32.xlu0 %v983
        %v985 = vpop.xlane.xlu0 %984
        %v986 = vsel %vm549, %v982, -inf
        %987 = vmax.xlane.f32.xlu0 %v986
        %v988 = vpop.xlane.xlu0 %987
        %v989 = vsub.f32 %v981, %v985
        %v990 = vsub.f32 %v982, %v988
        %v991 = vmul.f32 %v989, 1.442695
        %v992 = vpow.pop %v991
        %v993 = vmul.f32 %v990, 1.442695
        %v994 = vpow.pop %v993
        %v995 = vsel %vm549, %v992, 0.0
        %996 = vadd.xlane.f32.xlu0 %v995
        %v997 = vpop.xlane.xlu0 %996
        %v998 = vsel %vm549, %v994, 0.0
        %999 = vadd.xlane.f32.xlu0 %v998
        %v1000 = vpop.xlane.xlu0 %999
        %v1001 = vrcp.pop %v997
        %v1002 = vrcp.pop %v1000
        %v1003 = vmul.f32 %v992, %v1001
        %v1004 = vmul.f32 %v994, %v1002
        %v1005 = vpack.c.bf16 %v1003, %v1003
        %v1006 = vpack.c.bf16 %v1004, %v1004
        %v1008 = vsel %vm549, %v1005, 0
        %1010 = vmatprep.subr.bf16.mxu0 0
        %1011 = vmatpush1.bf16.msra.mxu0 %v581
        %1012 = vmatprep.subr.bf16.mxu0 0
        %1013 = vmatpush1.bf16.msra.mxu0 0
        %1014 = vmatprep.subr.bf16.mxu0 0
        %1015 = vmatpush1.bf16.msra.mxu0 0
        %1016 = vmatprep.subr.bf16.mxu0 0
        %1017 = vmatpush1.bf16.msra.mxu0 0
        %1018 = vmatprep.subr.bf16.mxu0 0
        %1019 = vmatpush1.bf16.msra.mxu0 0
        %1020 = vmatprep.subr.bf16.mxu0 0
        %1021 = vmatpush1.bf16.msra.mxu0 0
        %1022 = vmatprep.subr.bf16.mxu0 0
        %1023 = vmatpush1.bf16.msra.mxu0 0
        %1024 = vmatprep.subr.bf16.mxu0 0
        %1025 = vmatpush1.bf16.msra.mxu0 0
        %1026 = vmatprep.subr.bf16.mxu0 0
        %1027 = vmatpush1.bf16.msra.mxu0 0
        %1028 = vmatprep.subr.bf16.mxu0 0
        %1029 = vmatpush1.bf16.msra.mxu0 0
        %1030 = vmatprep.subr.bf16.mxu0 0
        %1031 = vmatpush1.bf16.msra.mxu0 0
        %1032 = vmatprep.subr.bf16.mxu0 0
        %1033 = vmatpush1.bf16.msra.mxu0 0
        %1034 = vmatprep.subr.bf16.mxu0 0
        %1035 = vmatpush1.bf16.msra.mxu0 0
        %1036 = vmatprep.subr.bf16.mxu0 0
        %1037 = vmatpush1.bf16.msra.mxu0 0
        %1038 = vmatprep.subr.bf16.mxu0 0
        %1039 = vmatpush1.bf16.msra.mxu0 0
        %1040 = vmatprep.subr.bf16.mxu0 0
        %1041 = vmatpush1.bf16.msra.mxu0 0
        %1042 = vmatprep.mubr.bf16.mxu0 0
        %1043 = vmatmul.mubr.bf16.gmra.mrb[0].mxu0 %v1008
        %v1044 = vpop.f32.mrb[0].mxu0
        %v1045 = vadd.f32 0.0, %v1044
        %v1046 = vpop.f32.mrb[0].mxu0
        %v1047 = vpop.f32.mrb[0].mxu0
        %v1048 = vpop.f32.mrb[0].mxu0
        %1049 = vdwg.mxu0
        %v1051 = vsel %vm549, %v1006, 0
        %1053 = vmatprep.subr.bf16.mxu0 0
        %1054 = vmatpush1.bf16.msra.mxu0 %v629
        %1055 = vmatprep.subr.bf16.mxu0 0
        %1056 = vmatpush1.bf16.msra.mxu0 0
        %1057 = vmatprep.subr.bf16.mxu0 0
        %1058 = vmatpush1.bf16.msra.mxu0 0
        %1059 = vmatprep.subr.bf16.mxu0 0
        %1060 = vmatpush1.bf16.msra.mxu0 0
        %1061 = vmatprep.subr.bf16.mxu0 0
        %1062 = vmatpush1.bf16.msra.mxu0 0
        %1063 = vmatprep.subr.bf16.mxu0 0
        %1064 = vmatpush1.bf16.msra.mxu0 0
        %1065 = vmatprep.subr.bf16.mxu0 0
        %1066 = vmatpush1.bf16.msra.mxu0 0
        %1067 = vmatprep.subr.bf16.mxu0 0
        %1068 = vmatpush1.bf16.msra.mxu0 0
        %1069 = vmatprep.subr.bf16.mxu0 0
        %1070 = vmatpush1.bf16.msra.mxu0 0
        %1071 = vmatprep.subr.bf16.mxu0 0
        %1072 = vmatpush1.bf16.msra.mxu0 0
        %1073 = vmatprep.subr.bf16.mxu0 0
        %1074 = vmatpush1.bf16.msra.mxu0 0
        %1075 = vmatprep.subr.bf16.mxu0 0
        %1076 = vmatpush1.bf16.msra.mxu0 0
        %1077 = vmatprep.subr.bf16.mxu0 0
        %1078 = vmatpush1.bf16.msra.mxu0 0
        %1079 = vmatprep.subr.bf16.mxu0 0
        %1080 = vmatpush1.bf16.msra.mxu0 0
        %1081 = vmatprep.subr.bf16.mxu0 0
        %1082 = vmatpush1.bf16.msra.mxu0 0
        %1083 = vmatprep.subr.bf16.mxu0 0
        %1084 = vmatpush1.bf16.msra.mxu0 0
        %1085 = vmatprep.mubr.bf16.mxu0 0
        %1086 = vmatmul.mubr.bf16.gmra.mrb[0].mxu0 %v1051
        %v1087 = vpop.f32.mrb[0].mxu0
        %v1088 = vadd.f32 0.0, %v1087
        %v1089 = vpop.f32.mrb[0].mxu0
        %v1090 = vpop.f32.mrb[0].mxu0
        %v1091 = vpop.f32.mrb[0].mxu0
        %1092 = vdwg.mxu0
        %v1093 = vmul.f32 %v1045, %v890
        %v1094 = vmul.f32 %v1088, %v890
        %v1095 = vadd.f32 %v884, %v1093
        %v1096 = vadd.f32 %v885, %v1094
        %vm1097 = vcmp.ge.s32.totalorder %v439, 24
        %vm1098 = vcmp.lt.s32.totalorder %v439, 32
        %vm1099 = vmand %vm1097, %vm1098
        %v1100 = vsel %vm1099, 1, 0
        %v1101 = vcvt.s32.f32 %v1100
        %v1102 = vmul.f32 %v428, %v1101
        %v1103 = vmul.f32 %v431, %v1101
        %v1104 = vpack.c.bf16 %v1102, %v1102
        %v1105 = vpack.c.bf16 %v1103, %v1103
        %v1107 = vsel %vm389, %v1104, 0
        %1109 = vmatprep.subr.bf16.mxu0 0
        %1110 = vmatpush1.bf16.xpose.msra.mxu0 %v456
        %1111 = vmatprep.subr.bf16.mxu0 0
        %1112 = vmatpush1.bf16.xpose.msra.mxu0 0
        %1113 = vmatprep.subr.bf16.mxu0 0
        %1114 = vmatpush1.bf16.xpose.msra.mxu0 0
        %1115 = vmatprep.subr.bf16.mxu0 0
        %1116 = vmatpush1.bf16.xpose.msra.mxu0 0
        %1117 = vmatprep.subr.bf16.mxu0 0
        %1118 = vmatpush1.bf16.xpose.msra.mxu0 0
        %1119 = vmatprep.subr.bf16.mxu0 0
        %1120 = vmatpush1.bf16.xpose.msra.mxu0 0
        %1121 = vmatprep.subr.bf16.mxu0 0
        %1122 = vmatpush1.bf16.xpose.msra.mxu0 0
        %1123 = vmatprep.subr.bf16.mxu0 0
        %1124 = vmatpush1.bf16.xpose.msra.mxu0 0
        %1125 = vmatprep.subr.bf16.mxu0 0
        %1126 = vmatpush1.bf16.xpose.msra.mxu0 0
        %1127 = vmatprep.subr.bf16.mxu0 0
        %1128 = vmatpush1.bf16.xpose.msra.mxu0 0
        %1129 = vmatprep.subr.bf16.mxu0 0
        %1130 = vmatpush1.bf16.xpose.msra.mxu0 0
        %1131 = vmatprep.subr.bf16.mxu0 0
        %1132 = vmatpush1.bf16.xpose.msra.mxu0 0
        %1133 = vmatprep.subr.bf16.mxu0 0
        %1134 = vmatpush1.bf16.xpose.msra.mxu0 0
        %1135 = vmatprep.subr.bf16.mxu0 0
        %1136 = vmatpush1.bf16.xpose.msra.mxu0 0
        %1137 = vmatprep.subr.bf16.mxu0 0
        %1138 = vmatpush1.bf16.xpose.msra.mxu0 0
        %1139 = vmatprep.subr.bf16.mxu0 0
        %1140 = vmatpush1.bf16.xpose.msra.mxu0 0
        %1141 = vmatprep.mubr.bf16.mxu0 0
        %1142 = vmatmul.mubr.bf16.gmra.mrb[0].mxu0 %v1107
        %v1143 = vpop.f32.mrb[0].mxu0
        %v1144 = vadd.f32 0.0, %v1143
        %v1145 = vpop.f32.mrb[0].mxu0
        %v1146 = vpop.f32.mrb[0].mxu0
        %v1147 = vpop.f32.mrb[0].mxu0
        %1148 = vdwg.mxu0
        %v1150 = vsel %vm389, %v1105, 0
        %1152 = vmatprep.subr.bf16.mxu0 0
        %1153 = vmatpush1.bf16.xpose.msra.mxu0 %v505
        %1154 = vmatprep.subr.bf16.mxu0 0
        %1155 = vmatpush1.bf16.xpose.msra.mxu0 0
        %1156 = vmatprep.subr.bf16.mxu0 0
        %1157 = vmatpush1.bf16.xpose.msra.mxu0 0
        %1158 = vmatprep.subr.bf16.mxu0 0
        %1159 = vmatpush1.bf16.xpose.msra.mxu0 0
        %1160 = vmatprep.subr.bf16.mxu0 0
        %1161 = vmatpush1.bf16.xpose.msra.mxu0 0
        %1162 = vmatprep.subr.bf16.mxu0 0
        %1163 = vmatpush1.bf16.xpose.msra.mxu0 0
        %1164 = vmatprep.subr.bf16.mxu0 0
        %1165 = vmatpush1.bf16.xpose.msra.mxu0 0
        %1166 = vmatprep.subr.bf16.mxu0 0
        %1167 = vmatpush1.bf16.xpose.msra.mxu0 0
        %1168 = vmatprep.subr.bf16.mxu0 0
        %1169 = vmatpush1.bf16.xpose.msra.mxu0 0
        %1170 = vmatprep.subr.bf16.mxu0 0
        %1171 = vmatpush1.bf16.xpose.msra.mxu0 0
        %1172 = vmatprep.subr.bf16.mxu0 0
        %1173 = vmatpush1.bf16.xpose.msra.mxu0 0
        %1174 = vmatprep.subr.bf16.mxu0 0
        %1175 = vmatpush1.bf16.xpose.msra.mxu0 0
        %1176 = vmatprep.subr.bf16.mxu0 0
        %1177 = vmatpush1.bf16.xpose.msra.mxu0 0
        %1178 = vmatprep.subr.bf16.mxu0 0
        %1179 = vmatpush1.bf16.xpose.msra.mxu0 0
        %1180 = vmatprep.subr.bf16.mxu0 0
        %1181 = vmatpush1.bf16.xpose.msra.mxu0 0
        %1182 = vmatprep.subr.bf16.mxu0 0
        %1183 = vmatpush1.bf16.xpose.msra.mxu0 0
        %1184 = vmatprep.mubr.bf16.mxu0 0
        %1185 = vmatmul.mubr.bf16.gmra.mrb[0].mxu0 %v1150
        %v1186 = vpop.f32.mrb[0].mxu0
        %v1187 = vadd.f32 0.0, %v1186
        %v1188 = vpop.f32.mrb[0].mxu0
        %v1189 = vpop.f32.mrb[0].mxu0
        %v1190 = vpop.f32.mrb[0].mxu0
        %1191 = vdwg.mxu0
        %v1192 = vmul.f32 %v1144, 0.35355338
        %v1193 = vmul.f32 %v1187, 0.35355338
        %v1194 = vsel %vm549, %v1192, -inf
        %1195 = vmax.xlane.f32.xlu0 %v1194
        %v1196 = vpop.xlane.xlu0 %1195
        %v1197 = vsel %vm549, %v1193, -inf
        %1198 = vmax.xlane.f32.xlu0 %v1197
        %v1199 = vpop.xlane.xlu0 %1198
        %v1200 = vsub.f32 %v1192, %v1196
        %v1201 = vsub.f32 %v1193, %v1199
        %v1202 = vmul.f32 %v1200, 1.442695
        %v1203 = vpow.pop %v1202
        %v1204 = vmul.f32 %v1201, 1.442695
        %v1205 = vpow.pop %v1204
        %v1206 = vsel %vm549, %v1203, 0.0
        %1207 = vadd.xlane.f32.xlu0 %v1206
        %v1208 = vpop.xlane.xlu0 %1207
        %v1209 = vsel %vm549, %v1205, 0.0
        %1210 = vadd.xlane.f32.xlu0 %v1209
        %v1211 = vpop.xlane.xlu0 %1210
        %v1212 = vrcp.pop %v1208
        %v1213 = vrcp.pop %v1211
        %v1214 = vmul.f32 %v1203, %v1212
        %v1215 = vmul.f32 %v1205, %v1213
        %v1216 = vpack.c.bf16 %v1214, %v1214
        %v1217 = vpack.c.bf16 %v1215, %v1215
        %v1219 = vsel %vm549, %v1216, 0
        %1221 = vmatprep.subr.bf16.mxu0 0
        %1222 = vmatpush1.bf16.msra.mxu0 %v581
        %1223 = vmatprep.subr.bf16.mxu0 0
        %1224 = vmatpush1.bf16.msra.mxu0 0
        %1225 = vmatprep.subr.bf16.mxu0 0
        %1226 = vmatpush1.bf16.msra.mxu0 0
        %1227 = vmatprep.subr.bf16.mxu0 0
        %1228 = vmatpush1.bf16.msra.mxu0 0
        %1229 = vmatprep.subr.bf16.mxu0 0
        %1230 = vmatpush1.bf16.msra.mxu0 0
        %1231 = vmatprep.subr.bf16.mxu0 0
        %1232 = vmatpush1.bf16.msra.mxu0 0
        %1233 = vmatprep.subr.bf16.mxu0 0
        %1234 = vmatpush1.bf16.msra.mxu0 0
        %1235 = vmatprep.subr.bf16.mxu0 0
        %1236 = vmatpush1.bf16.msra.mxu0 0
        %1237 = vmatprep.subr.bf16.mxu0 0
        %1238 = vmatpush1.bf16.msra.mxu0 0
        %1239 = vmatprep.subr.bf16.mxu0 0
        %1240 = vmatpush1.bf16.msra.mxu0 0
        %1241 = vmatprep.subr.bf16.mxu0 0
        %1242 = vmatpush1.bf16.msra.mxu0 0
        %1243 = vmatprep.subr.bf16.mxu0 0
        %1244 = vmatpush1.bf16.msra.mxu0 0
        %1245 = vmatprep.subr.bf16.mxu0 0
        %1246 = vmatpush1.bf16.msra.mxu0 0
        %1247 = vmatprep.subr.bf16.mxu0 0
        %1248 = vmatpush1.bf16.msra.mxu0 0
        %1249 = vmatprep.subr.bf16.mxu0 0
        %1250 = vmatpush1.bf16.msra.mxu0 0
        %1251 = vmatprep.subr.bf16.mxu0 0
        %1252 = vmatpush1.bf16.msra.mxu0 0
        %1253 = vmatprep.mubr.bf16.mxu0 0
        %1254 = vmatmul.mubr.bf16.gmra.mrb[0].mxu0 %v1219
        %v1255 = vpop.f32.mrb[0].mxu0
        %v1256 = vadd.f32 0.0, %v1255
        %v1257 = vpop.f32.mrb[0].mxu0
        %v1258 = vpop.f32.mrb[0].mxu0
        %v1259 = vpop.f32.mrb[0].mxu0
        %1260 = vdwg.mxu0
        %v1262 = vsel %vm549, %v1217, 0
        %1264 = vmatprep.subr.bf16.mxu0 0
        %1265 = vmatpush1.bf16.msra.mxu0 %v629
        %1266 = vmatprep.subr.bf16.mxu0 0
        %1267 = vmatpush1.bf16.msra.mxu0 0
        %1268 = vmatprep.subr.bf16.mxu0 0
        %1269 = vmatpush1.bf16.msra.mxu0 0
        %1270 = vmatprep.subr.bf16.mxu0 0
        %1271 = vmatpush1.bf16.msra.mxu0 0
        %1272 = vmatprep.subr.bf16.mxu0 0
        %1273 = vmatpush1.bf16.msra.mxu0 0
        %1274 = vmatprep.subr.bf16.mxu0 0
        %1275 = vmatpush1.bf16.msra.mxu0 0
        %1276 = vmatprep.subr.bf16.mxu0 0
        %1277 = vmatpush1.bf16.msra.mxu0 0
        %1278 = vmatprep.subr.bf16.mxu0 0
        %1279 = vmatpush1.bf16.msra.mxu0 0
        %1280 = vmatprep.subr.bf16.mxu0 0
        %1281 = vmatpush1.bf16.msra.mxu0 0
        %1282 = vmatprep.subr.bf16.mxu0 0
        %1283 = vmatpush1.bf16.msra.mxu0 0
        %1284 = vmatprep.subr.bf16.mxu0 0
        %1285 = vmatpush1.bf16.msra.mxu0 0
        %1286 = vmatprep.subr.bf16.mxu0 0
        %1287 = vmatpush1.bf16.msra.mxu0 0
        %1288 = vmatprep.subr.bf16.mxu0 0
        %1289 = vmatpush1.bf16.msra.mxu0 0
        %1290 = vmatprep.subr.bf16.mxu0 0
        %1291 = vmatpush1.bf16.msra.mxu0 0
        %1292 = vmatprep.subr.bf16.mxu0 0
        %1293 = vmatpush1.bf16.msra.mxu0 0
        %1294 = vmatprep.subr.bf16.mxu0 0
        %1295 = vmatpush1.bf16.msra.mxu0 0
        %1296 = vmatprep.mubr.bf16.mxu0 0
        %1297 = vmatmul.mubr.bf16.gmra.mrb[0].mxu0 %v1262
        %v1298 = vpop.f32.mrb[0].mxu0
        %v1299 = vadd.f32 0.0, %v1298
        %v1300 = vpop.f32.mrb[0].mxu0
        %v1301 = vpop.f32.mrb[0].mxu0
        %v1302 = vpop.f32.mrb[0].mxu0
        %1303 = vdwg.mxu0
        %v1304 = vmul.f32 %v1256, %v1101
        %v1305 = vmul.f32 %v1299, %v1101
        %v1306 = vadd.f32 %v1095, %v1304
        %v1307 = vadd.f32 %v1096, %v1305
        %v1308 = vpack.c.bf16 %v1307, %v1306
        %v1309 = vld [vmem:[%s339] sm:$0xf]
        %v1310 = vld [vmem:[%s339 + $0x4] sm:$0xf]
        %v1311 = vld [vmem:[%s339 + $0x8] sm:$0xf]
        %v1312 = vld [vmem:[%s339 + $0xc] sm:$0xf]
        %v1313 = vlaneseq
        %v1314 = vshrl.u32 %v1313, 7
        %v1315 = vsub.s32 1, %v1314
        %v1316 = vrot.slane %v367, %v1315
        %v1321 = vunpack.c.l.b16 %v1309
        %v1322 = vunpack.c.l.b16 %v1310
        %v1323 = vunpack.c.l.b16 %v1311
        %v1324 = vunpack.c.l.b16 %v1312
        %v1325 = vpack.c.b16 %v1322, %v1321
        %v1326 = vpack.c.b16 %v1324, %v1323
        %v1330 = vsel %vm389, %v1308, 0
        %1332 = vmatprep.subr.bf16.mxu0 0
        %1333 = vmatpush1.bf16.msra.mxu0 %v1325
        %1334 = vmatprep.subr.bf16.mxu0 0
        %1335 = vmatpush1.bf16.msra.mxu0 %v1326
        %1336 = vmatprep.subr.bf16.mxu0 0
        %1337 = vmatpush1.bf16.msra.mxu0 0
        %1338 = vmatprep.subr.bf16.mxu0 0
        %1339 = vmatpush1.bf16.msra.mxu0 0
        %1340 = vmatprep.subr.bf16.mxu0 0
        %1341 = vmatpush1.bf16.msra.mxu0 0
        %1342 = vmatprep.subr.bf16.mxu0 0
        %1343 = vmatpush1.bf16.msra.mxu0 0
        %1344 = vmatprep.subr.bf16.mxu0 0
        %1345 = vmatpush1.bf16.msra.mxu0 0
        %1346 = vmatprep.subr.bf16.mxu0 0
        %1347 = vmatpush1.bf16.msra.mxu0 0
        %1348 = vmatprep.subr.bf16.mxu0 0
        %1349 = vmatpush1.bf16.msra.mxu0 0
        %1350 = vmatprep.subr.bf16.mxu0 0
        %1351 = vmatpush1.bf16.msra.mxu0 0
        %1352 = vmatprep.subr.bf16.mxu0 0
        %1353 = vmatpush1.bf16.msra.mxu0 0
        %1354 = vmatprep.subr.bf16.mxu0 0
        %1355 = vmatpush1.bf16.msra.mxu0 0
        %1356 = vmatprep.subr.bf16.mxu0 0
        %1357 = vmatpush1.bf16.msra.mxu0 0
        %1358 = vmatprep.subr.bf16.mxu0 0
        %1359 = vmatpush1.bf16.msra.mxu0 0
        %1360 = vmatprep.subr.bf16.mxu0 0
        %1361 = vmatpush1.bf16.msra.mxu0 0
        %1362 = vmatprep.subr.bf16.mxu0 0
        %1363 = vmatpush1.bf16.msra.mxu0 0
        %1364 = vmatprep.mubr.bf16.mxu0 0
        %1365 = vmatmul.mubr.bf16.gmra.mrb[0].mxu0 %v1330
        %v1366 = vpop.f32.mrb[0].mxu0
        %v1367 = vadd.f32 %v1316, %v1366
        %v1368 = vpop.f32.mrb[0].mxu0
        %v1369 = vpop.f32.mrb[0].mxu0
        %v1370 = vadd.f32 %v1316, %v1369
        %v1371 = vpop.f32.mrb[0].mxu0
        %1372 = vdwg.mxu0
        %v1373 = vadd.f32 %v365, %v1367
        %v1374 = vadd.f32 %v366, %v1370
        %v1375 = vsel %vm389, %v1373, 0.0
        %1376 = vadd.xlane.f32.xlu0 %v1375
        %v1377 = vpop.xlane.xlu0 %1376
        %v1378 = vsel %vm389, %v1374, 0.0
        %1379 = vadd.xlane.f32.xlu0 %v1378
        %v1380 = vpop.xlane.xlu0 %1379
        %v1381 = vrcp.pop 32.0
        %v1382 = vmul.f32 %v1377, %v1381
        %v1383 = vmul.f32 %v1380, %v1381
        %v1384 = vsub.f32 %v1373, %v1382
        %v1385 = vsub.f32 %v1374, %v1383
        %v1386 = vmul.f32 %v1384, %v1384
        %v1387 = vmul.f32 %v1385, %v1385
        %v1388 = vsel %vm389, %v1386, 0.0
        %1389 = vadd.xlane.f32.xlu0 %v1388
        %v1390 = vpop.xlane.xlu0 %1389
        %v1391 = vsel %vm389, %v1387, 0.0
        %1392 = vadd.xlane.f32.xlu0 %v1391
        %v1393 = vpop.xlane.xlu0 %1392
        %v1394 = vmul.f32 %v1390, %v1381
        %v1395 = vmul.f32 %v1393, %v1381
        %v1396 = vadd.f32 %v1394, 1e-05
        %v1397 = vadd.f32 %v1395, 1e-05
        %v1398 = vrsqrt.pop %v1396
        %v1399 = vrsqrt.pop %v1397
        %v1400 = vmul.f32 %v1384, %v1398
        %v1401 = vmul.f32 %v1385, %v1399
        %v1402 = vlaneseq
        %v1403 = vshrl.u32 %v1402, 7
        %v1404 = vsub.s32 2, %v1403
        %v1405 = vrot.slane %v367, %v1404
        %v1406 = vmul.f32 %v1400, %v1405
        %v1407 = vmul.f32 %v1401, %v1405
        %v1408 = vlaneseq
        %v1409 = vshrl.u32 %v1408, 7
        %v1410 = vsub.s32 3, %v1409
        %v1411 = vrot.slane %v367, %v1410
        %v1412 = vadd.f32 %v1406, %v1411
        %v1413 = vadd.f32 %v1407, %v1411
        %v1414 = vpack.c.bf16 %v1413, %v1412
        %v1415 = vld [vmem:[%s344] sm:$0xf]
        %v1416 = vld [vmem:[%s344 + $0x4] sm:$0xf]
        %v1417 = vld [vmem:[%s344 + $0x8] sm:$0xf]
        %v1418 = vld [vmem:[%s344 + $0xc] sm:$0xf]
        %v1419 = vlaneseq
        %v1420 = vshrl.u32 %v1419, 7
        %v1421 = vsub.s32 4, %v1420
        %v1422 = vrot.slane %v367, %v1421
        %v1427 = vunpack.c.l.b16 %v1415
        %v1428 = vunpack.c.l.b16 %v1416
        %v1429 = vunpack.c.l.b16 %v1417
        %v1430 = vunpack.c.l.b16 %v1418
        %v1431 = vpack.c.b16 %v1428, %v1427
        %v1432 = vpack.c.b16 %v1430, %v1429
        %v1436 = vsel %vm389, %v1414, 0
        %1438 = vmatprep.subr.bf16.mxu0 0
        %1439 = vmatpush1.bf16.msra.mxu0 %v1431
        %1440 = vmatprep.subr.bf16.mxu0 0
        %1441 = vmatpush1.bf16.msra.mxu0 %v1432
        %1442 = vmatprep.subr.bf16.mxu0 0
        %1443 = vmatpush1.bf16.msra.mxu0 0
        %1444 = vmatprep.subr.bf16.mxu0 0
        %1445 = vmatpush1.bf16.msra.mxu0 0
        %1446 = vmatprep.subr.bf16.mxu0 0
        %1447 = vmatpush1.bf16.msra.mxu0 0
        %1448 = vmatprep.subr.bf16.mxu0 0
        %1449 = vmatpush1.bf16.msra.mxu0 0
        %1450 = vmatprep.subr.bf16.mxu0 0
        %1451 = vmatpush1.bf16.msra.mxu0 0
        %1452 = vmatprep.subr.bf16.mxu0 0
        %1453 = vmatpush1.bf16.msra.mxu0 0
        %1454 = vmatprep.subr.bf16.mxu0 0
        %1455 = vmatpush1.bf16.msra.mxu0 0
        %1456 = vmatprep.subr.bf16.mxu0 0
        %1457 = vmatpush1.bf16.msra.mxu0 0
        %1458 = vmatprep.subr.bf16.mxu0 0
        %1459 = vmatpush1.bf16.msra.mxu0 0
        %1460 = vmatprep.subr.bf16.mxu0 0
        %1461 = vmatpush1.bf16.msra.mxu0 0
        %1462 = vmatprep.subr.bf16.mxu0 0
        %1463 = vmatpush1.bf16.msra.mxu0 0
        %1464 = vmatprep.subr.bf16.mxu0 0
        %1465 = vmatpush1.bf16.msra.mxu0 0
        %1466 = vmatprep.subr.bf16.mxu0 0
        %1467 = vmatpush1.bf16.msra.mxu0 0
        %1468 = vmatprep.subr.bf16.mxu0 0
        %1469 = vmatpush1.bf16.msra.mxu0 0
        %1470 = vmatprep.mubr.bf16.mxu0 0
        %1471 = vmatmul.mubr.bf16.gmra.mrb[0].mxu0 %v1436
        %v1472 = vpop.f32.mrb[0].mxu0
        %v1473 = vadd.f32 %v1422, %v1472
        %v1474 = vpop.f32.mrb[0].mxu0
        %v1475 = vpop.f32.mrb[0].mxu0
        %v1476 = vadd.f32 %v1422, %v1475
        %v1477 = vpop.f32.mrb[0].mxu0
        %1478 = vdwg.mxu0
        %v1479 = vmax.f32 %v1473, 0.0
        %v1480 = vmax.f32 %v1476, 0.0
        %v1481 = vpack.c.bf16 %v1480, %v1479
        %v1482 = vld [vmem:[%s349] sm:$0xf]
        %v1483 = vld [vmem:[%s349 + $0x4] sm:$0xf]
        %v1484 = vld [vmem:[%s349 + $0x8] sm:$0xf]
        %v1485 = vld [vmem:[%s349 + $0xc] sm:$0xf]
        %v1486 = vld [vmem:[%s349 + $0x10] sm:$0xf]
        %v1487 = vld [vmem:[%s349 + $0x14] sm:$0xf]
        %v1488 = vld [vmem:[%s349 + $0x18] sm:$0xf]
        %v1489 = vld [vmem:[%s349 + $0x1c] sm:$0xf]
        %v1490 = vld [vmem:[%s349 + $0x20] sm:$0xf]
        %v1491 = vld [vmem:[%s349 + $0x24] sm:$0xf]
        %v1492 = vld [vmem:[%s349 + $0x28] sm:$0xf]
        %v1493 = vld [vmem:[%s349 + $0x2c] sm:$0xf]
        %v1494 = vld [vmem:[%s349 + $0x30] sm:$0xf]
        %v1495 = vld [vmem:[%s349 + $0x34] sm:$0xf]
        %v1496 = vld [vmem:[%s349 + $0x38] sm:$0xf]
        %v1497 = vld [vmem:[%s349 + $0x3c] sm:$0xf]
        %v1498 = vlaneseq
        %v1499 = vshrl.u32 %v1498, 7
        %v1500 = vsub.s32 5, %v1499
        %v1501 = vrot.slane %v367, %v1500
        %v1518 = vunpack.c.l.b16 %v1482
        %v1519 = vunpack.c.l.b16 %v1483
        %v1520 = vunpack.c.l.b16 %v1484
        %v1521 = vunpack.c.l.b16 %v1485
        %v1522 = vunpack.c.l.b16 %v1486
        %v1523 = vunpack.c.l.b16 %v1487
        %v1524 = vunpack.c.l.b16 %v1488
        %v1525 = vunpack.c.l.b16 %v1489
        %v1526 = vunpack.c.l.b16 %v1490
        %v1527 = vunpack.c.l.b16 %v1491
        %v1528 = vunpack.c.l.b16 %v1492
        %v1529 = vunpack.c.l.b16 %v1493
        %v1530 = vunpack.c.l.b16 %v1494
        %v1531 = vunpack.c.l.b16 %v1495
        %v1532 = vunpack.c.l.b16 %v1496
        %v1533 = vunpack.c.l.b16 %v1497
        %v1534 = vpack.c.b16 %v1519, %v1518
        %v1535 = vpack.c.b16 %v1521, %v1520
        %v1536 = vpack.c.b16 %v1523, %v1522
        %v1537 = vpack.c.b16 %v1525, %v1524
        %v1538 = vpack.c.b16 %v1527, %v1526
        %v1539 = vpack.c.b16 %v1529, %v1528
        %v1540 = vpack.c.b16 %v1531, %v1530
        %v1541 = vpack.c.b16 %v1533, %v1532
        %1550 = vmatprep.subr.bf16.mxu0 0
        %1551 = vmatpush1.bf16.msra.mxu0 %v1534
        %1552 = vmatprep.subr.bf16.mxu0 0
        %1553 = vmatpush1.bf16.msra.mxu0 %v1535
        %1554 = vmatprep.subr.bf16.mxu0 0
        %1555 = vmatpush1.bf16.msra.mxu0 %v1536
        %1556 = vmatprep.subr.bf16.mxu0 0
        %1557 = vmatpush1.bf16.msra.mxu0 %v1537
        %1558 = vmatprep.subr.bf16.mxu0 0
        %1559 = vmatpush1.bf16.msra.mxu0 %v1538
        %1560 = vmatprep.subr.bf16.mxu0 0
        %1561 = vmatpush1.bf16.msra.mxu0 %v1539
        %1562 = vmatprep.subr.bf16.mxu0 0
        %1563 = vmatpush1.bf16.msra.mxu0 %v1540
        %1564 = vmatprep.subr.bf16.mxu0 0
        %1565 = vmatpush1.bf16.msra.mxu0 %v1541
        %1566 = vmatprep.subr.bf16.mxu0 0
        %1567 = vmatpush1.bf16.msra.mxu0 0
        %1568 = vmatprep.subr.bf16.mxu0 0
        %1569 = vmatpush1.bf16.msra.mxu0 0
        %1570 = vmatprep.subr.bf16.mxu0 0
        %1571 = vmatpush1.bf16.msra.mxu0 0
        %1572 = vmatprep.subr.bf16.mxu0 0
        %1573 = vmatpush1.bf16.msra.mxu0 0
        %1574 = vmatprep.subr.bf16.mxu0 0
        %1575 = vmatpush1.bf16.msra.mxu0 0
        %1576 = vmatprep.subr.bf16.mxu0 0
        %1577 = vmatpush1.bf16.msra.mxu0 0
        %1578 = vmatprep.subr.bf16.mxu0 0
        %1579 = vmatpush1.bf16.msra.mxu0 0
        %1580 = vmatprep.subr.bf16.mxu0 0
        %1581 = vmatpush1.bf16.msra.mxu0 0
        %1582 = vmatprep.mubr.bf16.mxu0 0
        %1583 = vmatmul.mubr.bf16.gmra.mrb[0].mxu0 %v1481
        %v1584 = vpop.f32.mrb[0].mxu0
        %v1585 = vadd.f32 %v1501, %v1584
        %v1586 = vpop.f32.mrb[0].mxu0
        %v1587 = vpop.f32.mrb[0].mxu0
        %v1588 = vadd.f32 %v1501, %v1587
        %v1589 = vpop.f32.mrb[0].mxu0
        %1590 = vdwg.mxu0
        %v1591 = vadd.f32 %v1412, %v1585
        %v1592 = vadd.f32 %v1413, %v1588
        %v1593 = vsel %vm389, %v1591, 0.0
        %1594 = vadd.xlane.f32.xlu0 %v1593
        %v1595 = vpop.xlane.xlu0 %1594
        %v1596 = vsel %vm389, %v1592, 0.0
        %1597 = vadd.xlane.f32.xlu0 %v1596
        %v1598 = vpop.xlane.xlu0 %1597
        %v1599 = vmul.f32 %v1595, %v1381
        %v1600 = vmul.f32 %v1598, %v1381
        %v1601 = vsub.f32 %v1591, %v1599
        %v1602 = vsub.f32 %v1592, %v1600
        %v1603 = vmul.f32 %v1601, %v1601
        %v1604 = vmul.f32 %v1602, %v1602
        %v1605 = vsel %vm389, %v1603, 0.0
        %1606 = vadd.xlane.f32.xlu0 %v1605
        %v1607 = vpop.xlane.xlu0 %1606
        %v1608 = vsel %vm389, %v1604, 0.0
        %1609 = vadd.xlane.f32.xlu0 %v1608
        %v1610 = vpop.xlane.xlu0 %1609
        %v1611 = vmul.f32 %v1607, %v1381
        %v1612 = vmul.f32 %v1610, %v1381
        %v1613 = vadd.f32 %v1611, 1e-05
        %v1614 = vadd.f32 %v1612, 1e-05
        %v1615 = vrsqrt.pop %v1613
        %v1616 = vrsqrt.pop %v1614
        %v1617 = vmul.f32 %v1601, %v1615
        %v1618 = vmul.f32 %v1602, %v1616
        %v1619 = vlaneseq
        %v1620 = vshrl.u32 %v1619, 7
        %v1621 = vsub.s32 6, %v1620
        %v1622 = vrot.slane %v367, %v1621
        %v1623 = vmul.f32 %v1617, %v1622
        %v1624 = vmul.f32 %v1618, %v1622
        %v1625 = vlaneseq
        %v1626 = vshrl.u32 %v1625, 7
        %v1627 = vsub.s32 7, %v1626
        %v1628 = vrot.slane %v367, %v1627
        %v1629 = vadd.f32 %v1623, %v1628
        %v1630 = vadd.f32 %v1624, %v1628
        %1631 = vst.msk [vmem:[#allocation2] sm:$0xff] %vm389, %v1629
        %1632 = vst.msk [vmem:[#allocation2 + $0x8] sm:$0xff] %vm389, %v1630
        // Predicated region
        $region49: #{tpu_custom_call.1} parent=43 // pred_check
          %p1633 = pneg %p204
        $region50: #{tpu_custom_call.1} parent=43 // pred_check_branch
          %1635 = sbr.rel (%p1633) target = $region52
        $region51: #{tpu_custom_call.1} parent=43 // pred_region
          %s1636 = smul.u32 2, %s22
          %s1638 = ssub.s32 256, 256
          %1639 = vsyncadd [#allocation3], %s1638
          %s1640 = smul.addr %s1636, 128
          %s1641 = scalar_lea.hbm %s6, %s1640
          %s1642 = sshll.u32 [#allocation2], 4
          %s1643 = int_to_ptr.vmem [resolvable:$true] %s1642
          %1648 = dma.vmem_to_hbm [thread:$0]  %s1643, 256, %s1641, [#allocation3], 128, 128, 8
        $region52: #{tpu_custom_call.1} parent=43 // pred_fallthru
          _
        // Predicated region
        $region53: #{tpu_custom_call.1} parent=43 // pred_check
          %p1649 = pneg %p204
        $region54: #{tpu_custom_call.1} parent=43 // pred_check_branch
          %1651 = sbr.rel (%p1649) target = $region56
        $region55: #{tpu_custom_call.1} parent=43 // pred_region
          %1652 = dma.done [#allocation3], 256
        $region56: #{tpu_custom_call.1} parent=43 // pred_fallthru
          _
      $region44: #{tpu_custom_call.1} parent=5 // pred_fallthru
        _
      %p1653 = scmp.le.s32.totalorder 2, %s13
      // Predicated region
      $region57: #{tpu_custom_call.1} parent=5 // pred_check
        %p1654 = pneg %p1653
      $region58: #{tpu_custom_call.1} parent=5 // pred_check_branch
        %1656 = sbr.rel (%p1654) target = $region60
      $region59: #{tpu_custom_call.1} parent=5 // pred_region
        %s1657 = ssub.s32 %s13, 2
      $region60: #{tpu_custom_call.1} parent=5 // pred_fallthru
        _
    $region6: #{tpu_custom_call.1} parent=1 // loop_footer
      %s17 = sadd.s32 1, %s13
    $region7: #{tpu_custom_call.1} parent=1 // loop_footer_branch
      %12 = sbr.rel target = $region3
    $region8: #{tpu_custom_call.1} parent=1 // loop_exit
      _
    %1658 = vsyncpa [#allocation3], 1
    %s1659 = scalar_lea.sflag [#allocation3], 1
    %1660 = vsyncpa %s1659, 1

</llo_original>
